<compile_context>
chip_gen: v7x
topology: tpu7x:2x2x1
jax: 0.10.0
libtpu: 0.0.40
codegen_flags: <defaults>
</compile_context>

<pallas_src>
import functools

import jax
import jax.numpy as jnp
from jax import lax
from jax.experimental import pallas as pl
from jax.experimental.pallas import tpu as pltpu

EPS = 1e-5
NUM_FEATURES = 6  # ConvInit.num_features


def _conv_stats_kernel(w_ref, b_ref, mask_ref, x0_ref, x1_ref, x2_ref,
                       y1_ref, stats_ref, p_sc, sum_sc, ssq_sc,
                       *, wp, l_out, cin_p, inv_count):
    """Phase 1: conv (in-kernel im2col + one MXU matmul) + BN statistic accumulation."""
    n_i = pl.program_id(0)
    d_i = pl.program_id(1)
    is_first = jnp.logical_and(n_i == 0, d_i == 0)
    is_last = jnp.logical_and(n_i == pl.num_programs(0) - 1,
                              d_i == pl.num_programs(1) - 1)

    @pl.when(is_first)
    def _():
        sum_sc[...] = jnp.zeros_like(sum_sc)
        ssq_sc[...] = jnp.zeros_like(ssq_sc)

    # In-kernel im2col: 27 shifted windows of the three (Cin_p, L_in) depth slabs are
    # written into a VMEM scratch patch matrix (K, L_out) at sublane-aligned offsets.
    slabs = (x0_ref[0, 0], x1_ref[0, 0], x2_ref[0, 0])
    for kd in range(3):
        s = slabs[kd]
        for kh in range(3):
            for kw in range(3):
                tap = (kd * 3 + kh) * 3 + kw
                off = kh * wp + kw
                p_sc[tap * cin_p:(tap + 1) * cin_p, :] = s[:, off:off + l_out]

    # Conv3d as one MXU matmul with the spatial axis on lanes: (Cout, K) @ (K, L_out).
    y = jnp.dot(w_ref[...], p_sc[...], preferred_element_type=jnp.float32) + b_ref[...]
    y1_ref[0, 0] = y.astype(y1_ref.dtype)

    # BN statistics over valid voxels only (halo columns masked out).
    m = mask_ref[...]                      # (1, L_out), {0,1}
    ym = y * m
    sum_sc[...] += jnp.sum(ym, axis=1, keepdims=True)
    ssq_sc[...] += jnp.sum(ym * y, axis=1, keepdims=True)

    @pl.when(is_last)
    def _():
        mean = sum_sc[...] * inv_count
        var = ssq_sc[...] * inv_count - mean * mean   # biased var (BN training mode)
        rstd = lax.rsqrt(var + EPS)
        stats_ref[:, 0:1] = mean
        stats_ref[:, 1:2] = rstd


def _bn_relu_kernel(stats_ref, y1_ref, y2_ref):
    """Phase 2: apply the finalized global statistics + ReLU, tile by tile."""
    mean = stats_ref[:, 0:1]
    rstd = stats_ref[:, 1:2]
    y = y1_ref[0, 0]
    y2_ref[0, 0] = jnp.maximum((y - mean) * rstd, 0.0).astype(y2_ref.dtype)


def conv_init_forward(x, weight, bias, *, compute_dtype=jnp.float32):
    """x: (N, Cin, D, H, W); weight: (Cout, Cin, 3, 3, 3); bias: (Cout,).
    Returns (y1, y2), both (N, Cout, D, H, W), matching ConvInit.forward:
    Conv3d(k=3, p=1) -> BatchNorm3d (training-mode batch stats, gamma=1, beta=0) -> ReLU.
    compute_dtype=jnp.bfloat16 halves input DMA bytes on v6e/v7x (accumulation stays f32),
    at a small accuracy cost."""
    N, Cin, D, H, W = x.shape
    Cout = weight.shape[0]
    Dp, Hp, Wp = D + 2, H + 2, W + 2
    cin_p = max(8, ((Cin + 7) // 8) * 8)   # sublane-align the channel axis (free in HBM)
    l_out = Hp * Wp                        # conv outputs per depth slab (incl. halo columns)
    hp_in = H + 5                          # extra zero rows so every tap window is in-bounds
    l_in = hp_in * Wp
    K = 27 * cin_p

    # --- glue: one zero-pad + one leading-dim transpose; no HBM im2col ---
    xpad = jnp.pad(x.astype(compute_dtype),
                   ((0, 0), (0, cin_p - Cin), (1, 1), (1, 4), (1, 1)))
    # (N, Cin_p, Dp, H+5, Wp) -> (N, Dp, Cin_p, (H+5)*Wp); minor dims stay contiguous.
    xr = jnp.transpose(xpad, (0, 2, 1, 3, 4)).reshape(N, Dp, cin_p, l_in)

    # weight (Cout, Cin, kd, kh, kw) -> (Cout, 27*Cin_p), tap-major / channel-minor,
    # matching the in-kernel patch-matrix row order.
    w_mat = jnp.pad(weight, ((0, 0), (0, cin_p - Cin), (0, 0), (0, 0), (0, 0)))
    w_mat = jnp.transpose(w_mat, (0, 2, 3, 4, 1)).reshape(Cout, K).astype(compute_dtype)
    b_col = bias.reshape(Cout, 1).astype(jnp.float32)

    # Mask of valid (non-halo) columns within one (Hp*Wp) output slab.
    pidx = jnp.arange(l_out, dtype=jnp.int32)
    mask = (((pidx // Wp) < H) & ((pidx % Wp) < W)).astype(jnp.float32).reshape(1, l_out)

    count = N * D * H * W
    itemsize = jnp.dtype(compute_dtype).itemsize

    kernel1 = functools.partial(_conv_stats_kernel, wp=Wp, l_out=l_out,
                                cin_p=cin_p, inv_count=1.0 / float(count))

    cost1 = pl.CostEstimate(
        flops=2 * N * D * l_out * K * Cout,
        transcendentals=Cout,
        bytes_accessed=(3 * N * Dp * cin_p * l_in * itemsize
                        + N * D * Cout * l_out * 4
                        + Cout * K * itemsize + Cout * 12 + l_out * 4),
    )

    y1_arr, stats = pl.pallas_call(
        kernel1,
        grid=(N, D),
        in_specs=[
            pl.BlockSpec((Cout, K), lambda n, d: (0, 0)),           # weights
            pl.BlockSpec((Cout, 1), lambda n, d: (0, 0)),           # bias
            pl.BlockSpec((1, l_out), lambda n, d: (0, 0)),          # valid-voxel mask
            pl.BlockSpec((1, 1, cin_p, l_in), lambda n, d: (n, d, 0, 0)),      # depth slab kd=0
            pl.BlockSpec((1, 1, cin_p, l_in), lambda n, d: (n, d + 1, 0, 0)),  # depth slab kd=1
            pl.BlockSpec((1, 1, cin_p, l_in), lambda n, d: (n, d + 2, 0, 0)),  # depth slab kd=2
        ],
        out_specs=(
            pl.BlockSpec((1, 1, Cout, l_out), lambda n, d: (n, d, 0, 0)),
            pl.BlockSpec((Cout, 2), lambda n, d: (0, 0)),
        ),
        out_shape=(
            jax.ShapeDtypeStruct((N, D, Cout, l_out), jnp.float32),
            jax.ShapeDtypeStruct((Cout, 2), jnp.float32),
        ),
        scratch_shapes=[
            pltpu.VMEM((K, l_out), compute_dtype),   # patch matrix
            pltpu.VMEM((Cout, 1), jnp.float32),      # running sum
            pltpu.VMEM((Cout, 1), jnp.float32),      # running sum of squares
        ],
        compiler_params=pltpu.CompilerParams(
            dimension_semantics=("arbitrary", "arbitrary"),  # global stats accumulation
            vmem_limit_bytes=32 * 1024 * 1024,
        ),
        cost_estimate=cost1,
    )(w_mat, b_col, mask, xr, xr, xr)

    cost2 = pl.CostEstimate(
        flops=3 * N * D * Cout * l_out,
        transcendentals=0,
        bytes_accessed=2 * N * D * Cout * l_out * 4 + Cout * 8,
    )
    y2_arr = pl.pallas_call(
        _bn_relu_kernel,
        grid=(N, D),
        in_specs=[
            pl.BlockSpec((Cout, 2), lambda n, d: (0, 0)),
            pl.BlockSpec((1, 1, Cout, l_out), lambda n, d: (n, d, 0, 0)),
        ],
        out_specs=pl.BlockSpec((1, 1, Cout, l_out), lambda n, d: (n, d, 0, 0)),
        out_shape=jax.ShapeDtypeStruct((N, D, Cout, l_out), jnp.float32),
        compiler_params=pltpu.CompilerParams(
            dimension_semantics=("parallel", "parallel"),
            vmem_limit_bytes=32 * 1024 * 1024,
        ),
        cost_estimate=cost2,
    )(stats, y1_arr)

    # --- glue: drop halo columns, back to NCDHW (leading-dim permutation only) ---
    def to_ncdhw(a):
        a = a.reshape(N, D, Cout, Hp, Wp)[:, :, :, :H, :W]
        return jnp.transpose(a, (0, 2, 1, 3, 4))

    return to_ncdhw(y1_arr), to_ncdhw(y2_arr)


def _reference(x, weight, bias):
    """Pure-JAX reference of the PyTorch forward (Conv3d + BN(train) + ReLU)."""
    y1 = lax.conv_general_dilated(
        x, weight, window_strides=(1, 1, 1), padding=((1, 1), (1, 1), (1, 1)),
        dimension_numbers=("NCDHW", "OIDHW", "NCDHW"),
    ) + bias.reshape(1, -1, 1, 1, 1)
    mean = jnp.mean(y1, axis=(0, 2, 3, 4), keepdims=True)
    var = jnp.mean((y1 - mean) ** 2, axis=(0, 2, 3, 4), keepdims=True)
    y2 = jnp.maximum((y1 - mean) * lax.rsqrt(var + EPS), 0.0)
    return y1, y2


if __name__ == "__main__":
    key = jax.random.PRNGKey(0)
    kx, kw, kb = jax.random.split(key, 3)

    N, Cin, D, H, W = 2, 4, 16, 16, 16
    Cout = NUM_FEATURES

    x = jax.random.normal(kx, (N, Cin, D, H, W), dtype=jnp.float32)
    # Deterministic parameter init (synthetic, mimicking Conv3d fan-in scaling).
    fan_in = Cin * 27
    bound = 1.0 / (fan_in ** 0.5)
    weight = jax.random.uniform(kw, (Cout, Cin, 3, 3, 3), jnp.float32, -bound, bound)
    bias = jax.random.uniform(kb, (Cout,), jnp.float32, -bound, bound)

    y1, y2 = jax.jit(conv_init_forward)(x, weight, bias)
    jax.block_until_ready((y1, y2))

    y1_ref, y2_ref = _reference(x, weight, bias)
    assert y1.shape == (N, Cout, D, H, W) and y2.shape == (N, Cout, D, H, W)
    assert jnp.allclose(y1, y1_ref, rtol=1e-4, atol=1e-4), "y1 mismatch"
    assert jnp.allclose(y2, y2_ref, rtol=1e-4, atol=2e-4), "y2 mismatch"

    print("KERNEL_OK")
</pallas_src>

<mosaic_0001>
module attributes {stable_mosaic.version = 11 : i64} {
  func.func @_conv_stats_kernel(%arg0: i32, %arg1: i32, %arg2: memref<6x216xf32, #tpu.memory_space<vmem>>, %arg3: memref<6x1xf32, #tpu.memory_space<vmem>>, %arg4: memref<1x324xf32, #tpu.memory_space<vmem>>, %arg5: memref<1x1x8x378xf32, #tpu.memory_space<vmem>>, %arg6: memref<1x1x8x378xf32, #tpu.memory_space<vmem>>, %arg7: memref<1x1x8x378xf32, #tpu.memory_space<vmem>>, %arg8: memref<1x1x6x324xf32, #tpu.memory_space<vmem>>, %arg9: memref<6x2xf32, #tpu.memory_space<vmem>>, %arg10: memref<216x324xf32, #tpu.memory_space<vmem>>, %arg11: memref<6x1xf32, #tpu.memory_space<vmem>>, %arg12: memref<6x1xf32, #tpu.memory_space<vmem>>) attributes {dimension_semantics = [#tpu.dimension_semantics<arbitrary>, #tpu.dimension_semantics<arbitrary>], iteration_bounds = array<i64: 2, 16>, scalar_prefetch = 0 : i64, scratch_operands = 3 : i64, tpu.core_type = #tpu.core_type<tc>, window_params = [{pipeline_mode = #tpu.pipeline_mode<synchronous>, transform_indices = @transform_0, window_bounds = array<i64: 6, 216>}, {pipeline_mode = #tpu.pipeline_mode<synchronous>, transform_indices = @transform_1, window_bounds = array<i64: 6, 1>}, {pipeline_mode = #tpu.pipeline_mode<synchronous>, transform_indices = @transform_2, window_bounds = array<i64: 1, 324>}, {transform_indices = @transform_3, window_bounds = array<i64: 1, 1, 8, 378>}, {transform_indices = @transform_4, window_bounds = array<i64: 1, 1, 8, 378>}, {transform_indices = @transform_5, window_bounds = array<i64: 1, 1, 8, 378>}, {transform_indices = @transform_6, window_bounds = array<i64: 1, 1, 6, 324>}, {pipeline_mode = #tpu.pipeline_mode<synchronous>, transform_indices = @transform_7, window_bounds = array<i64: 6, 2>}]} {
    %c0_i32 = arith.constant 0 : i32
    %0 = arith.cmpi eq, %arg0, %c0_i32 : i32
    %c0_i32_0 = arith.constant 0 : i32
    %1 = arith.cmpi eq, %arg1, %c0_i32_0 : i32
    %2 = arith.andi %0, %1 : i1
    %c1_i32 = arith.constant 1 : i32
    %3 = arith.cmpi eq, %arg0, %c1_i32 : i32
    %c15_i32 = arith.constant 15 : i32
    %4 = arith.cmpi eq, %arg1, %c15_i32 : i32
    %5 = arith.andi %3, %4 : i1
    %6 = arith.extui %2 : i1 to i32
    %c0_i32_1 = arith.constant 0 : i32
    %7 = arith.cmpi ne, %6, %c0_i32_1 : i32
    scf.if %7 {
      %cst_64 = arith.constant 0.000000e+00 : f32
      %93 = vector.broadcast %cst_64 : f32 to vector<6x1xf32>
      %c0_65 = arith.constant 0 : index
      %c0_66 = arith.constant 0 : index
      %94 = vector.load %arg11[%c0_65, %c0_66] : memref<6x1xf32, #tpu.memory_space<vmem>>, vector<6x1xf32>
      tpu.vector_store %arg11[%c0_65, %c0_66], %93 {strides = array<i32>} : memref<6x1xf32, #tpu.memory_space<vmem>>, vector<6x1xf32>,
      %cst_67 = arith.constant 0.000000e+00 : f32
      %95 = vector.broadcast %cst_67 : f32 to vector<6x1xf32>
      %c0_68 = arith.constant 0 : index
      %c0_69 = arith.constant 0 : index
      %96 = vector.load %arg12[%c0_68, %c0_69] : memref<6x1xf32, #tpu.memory_space<vmem>>, vector<6x1xf32>
      tpu.vector_store %arg12[%c0_68, %c0_69], %95 {strides = array<i32>} : memref<6x1xf32, #tpu.memory_space<vmem>>, vector<6x1xf32>,
    } else {
    }
    %c0 = arith.constant 0 : index
    %c0_2 = arith.constant 0 : index
    %c0_3 = arith.constant 0 : index
    %c0_4 = arith.constant 0 : index
    %8 = vector.load %arg5[%c0, %c0_2, %c0_3, %c0_4] : memref<1x1x8x378xf32, #tpu.memory_space<vmem>>, vector<1x1x8x378xf32>
    %9 = vector.shape_cast %8 : vector<1x1x8x378xf32> to vector<8x378xf32>
    %c0_5 = arith.constant 0 : index
    %c0_6 = arith.constant 0 : index
    %c0_7 = arith.constant 0 : index
    %c0_8 = arith.constant 0 : index
    %10 = vector.load %arg6[%c0_5, %c0_6, %c0_7, %c0_8] : memref<1x1x8x378xf32, #tpu.memory_space<vmem>>, vector<1x1x8x378xf32>
    %11 = vector.shape_cast %10 : vector<1x1x8x378xf32> to vector<8x378xf32>
    %c0_9 = arith.constant 0 : index
    %c0_10 = arith.constant 0 : index
    %c0_11 = arith.constant 0 : index
    %c0_12 = arith.constant 0 : index
    %12 = vector.load %arg7[%c0_9, %c0_10, %c0_11, %c0_12] : memref<1x1x8x378xf32, #tpu.memory_space<vmem>>, vector<1x1x8x378xf32>
    %13 = vector.shape_cast %12 : vector<1x1x8x378xf32> to vector<8x378xf32>
    %14 = vector.extract_strided_slice %9 {offsets = [0, 0], sizes = [8, 324], strides = [1, 1]} : vector<8x378xf32> to vector<8x324xf32>
    %c0_13 = arith.constant 0 : index
    %c0_14 = arith.constant 0 : index
    %15 = vector.load %arg10[%c0_13, %c0_14] : memref<216x324xf32, #tpu.memory_space<vmem>>, vector<8x324xf32>
    tpu.vector_store %arg10[%c0_13, %c0_14], %14 {strides = array<i32>} : memref<216x324xf32, #tpu.memory_space<vmem>>, vector<8x324xf32>,
    %16 = vector.extract_strided_slice %9 {offsets = [0, 1], sizes = [8, 324], strides = [1, 1]} : vector<8x378xf32> to vector<8x324xf32>
    %c8 = arith.constant 8 : index
    %c0_15 = arith.constant 0 : index
    %17 = vector.load %arg10[%c8, %c0_15] : memref<216x324xf32, #tpu.memory_space<vmem>>, vector<8x324xf32>
    tpu.vector_store %arg10[%c8, %c0_15], %16 {strides = array<i32>} : memref<216x324xf32, #tpu.memory_space<vmem>>, vector<8x324xf32>,
    %18 = vector.extract_strided_slice %9 {offsets = [0, 2], sizes = [8, 324], strides = [1, 1]} : vector<8x378xf32> to vector<8x324xf32>
    %c16 = arith.constant 16 : index
    %c0_16 = arith.constant 0 : index
    %19 = vector.load %arg10[%c16, %c0_16] : memref<216x324xf32, #tpu.memory_space<vmem>>, vector<8x324xf32>
    tpu.vector_store %arg10[%c16, %c0_16], %18 {strides = array<i32>} : memref<216x324xf32, #tpu.memory_space<vmem>>, vector<8x324xf32>,
    %20 = vector.extract_strided_slice %9 {offsets = [0, 18], sizes = [8, 324], strides = [1, 1]} : vector<8x378xf32> to vector<8x324xf32>
    %c24 = arith.constant 24 : index
    %c0_17 = arith.constant 0 : index
    %21 = vector.load %arg10[%c24, %c0_17] : memref<216x324xf32, #tpu.memory_space<vmem>>, vector<8x324xf32>
    tpu.vector_store %arg10[%c24, %c0_17], %20 {strides = array<i32>} : memref<216x324xf32, #tpu.memory_space<vmem>>, vector<8x324xf32>,
    %22 = vector.extract_strided_slice %9 {offsets = [0, 19], sizes = [8, 324], strides = [1, 1]} : vector<8x378xf32> to vector<8x324xf32>
    %c32 = arith.constant 32 : index
    %c0_18 = arith.constant 0 : index
    %23 = vector.load %arg10[%c32, %c0_18] : memref<216x324xf32, #tpu.memory_space<vmem>>, vector<8x324xf32>
    tpu.vector_store %arg10[%c32, %c0_18], %22 {strides = array<i32>} : memref<216x324xf32, #tpu.memory_space<vmem>>, vector<8x324xf32>,
    %24 = vector.extract_strided_slice %9 {offsets = [0, 20], sizes = [8, 324], strides = [1, 1]} : vector<8x378xf32> to vector<8x324xf32>
    %c40 = arith.constant 40 : index
    %c0_19 = arith.constant 0 : index
    %25 = vector.load %arg10[%c40, %c0_19] : memref<216x324xf32, #tpu.memory_space<vmem>>, vector<8x324xf32>
    tpu.vector_store %arg10[%c40, %c0_19], %24 {strides = array<i32>} : memref<216x324xf32, #tpu.memory_space<vmem>>, vector<8x324xf32>,
    %26 = vector.extract_strided_slice %9 {offsets = [0, 36], sizes = [8, 324], strides = [1, 1]} : vector<8x378xf32> to vector<8x324xf32>
    %c48 = arith.constant 48 : index
    %c0_20 = arith.constant 0 : index
    %27 = vector.load %arg10[%c48, %c0_20] : memref<216x324xf32, #tpu.memory_space<vmem>>, vector<8x324xf32>
    tpu.vector_store %arg10[%c48, %c0_20], %26 {strides = array<i32>} : memref<216x324xf32, #tpu.memory_space<vmem>>, vector<8x324xf32>,
    %28 = vector.extract_strided_slice %9 {offsets = [0, 37], sizes = [8, 324], strides = [1, 1]} : vector<8x378xf32> to vector<8x324xf32>
    %c56 = arith.constant 56 : index
    %c0_21 = arith.constant 0 : index
    %29 = vector.load %arg10[%c56, %c0_21] : memref<216x324xf32, #tpu.memory_space<vmem>>, vector<8x324xf32>
    tpu.vector_store %arg10[%c56, %c0_21], %28 {strides = array<i32>} : memref<216x324xf32, #tpu.memory_space<vmem>>, vector<8x324xf32>,
    %30 = vector.extract_strided_slice %9 {offsets = [0, 38], sizes = [8, 324], strides = [1, 1]} : vector<8x378xf32> to vector<8x324xf32>
    %c64 = arith.constant 64 : index
    %c0_22 = arith.constant 0 : index
    %31 = vector.load %arg10[%c64, %c0_22] : memref<216x324xf32, #tpu.memory_space<vmem>>, vector<8x324xf32>
    tpu.vector_store %arg10[%c64, %c0_22], %30 {strides = array<i32>} : memref<216x324xf32, #tpu.memory_space<vmem>>, vector<8x324xf32>,
    %32 = vector.extract_strided_slice %11 {offsets = [0, 0], sizes = [8, 324], strides = [1, 1]} : vector<8x378xf32> to vector<8x324xf32>
    %c72 = arith.constant 72 : index
    %c0_23 = arith.constant 0 : index
    %33 = vector.load %arg10[%c72, %c0_23] : memref<216x324xf32, #tpu.memory_space<vmem>>, vector<8x324xf32>
    tpu.vector_store %arg10[%c72, %c0_23], %32 {strides = array<i32>} : memref<216x324xf32, #tpu.memory_space<vmem>>, vector<8x324xf32>,
    %34 = vector.extract_strided_slice %11 {offsets = [0, 1], sizes = [8, 324], strides = [1, 1]} : vector<8x378xf32> to vector<8x324xf32>
    %c80 = arith.constant 80 : index
    %c0_24 = arith.constant 0 : index
    %35 = vector.load %arg10[%c80, %c0_24] : memref<216x324xf32, #tpu.memory_space<vmem>>, vector<8x324xf32>
    tpu.vector_store %arg10[%c80, %c0_24], %34 {strides = array<i32>} : memref<216x324xf32, #tpu.memory_space<vmem>>, vector<8x324xf32>,
    %36 = vector.extract_strided_slice %11 {offsets = [0, 2], sizes = [8, 324], strides = [1, 1]} : vector<8x378xf32> to vector<8x324xf32>
    %c88 = arith.constant 88 : index
    %c0_25 = arith.constant 0 : index
    %37 = vector.load %arg10[%c88, %c0_25] : memref<216x324xf32, #tpu.memory_space<vmem>>, vector<8x324xf32>
    tpu.vector_store %arg10[%c88, %c0_25], %36 {strides = array<i32>} : memref<216x324xf32, #tpu.memory_space<vmem>>, vector<8x324xf32>,
    %38 = vector.extract_strided_slice %11 {offsets = [0, 18], sizes = [8, 324], strides = [1, 1]} : vector<8x378xf32> to vector<8x324xf32>
    %c96 = arith.constant 96 : index
    %c0_26 = arith.constant 0 : index
    %39 = vector.load %arg10[%c96, %c0_26] : memref<216x324xf32, #tpu.memory_space<vmem>>, vector<8x324xf32>
    tpu.vector_store %arg10[%c96, %c0_26], %38 {strides = array<i32>} : memref<216x324xf32, #tpu.memory_space<vmem>>, vector<8x324xf32>,
    %40 = vector.extract_strided_slice %11 {offsets = [0, 19], sizes = [8, 324], strides = [1, 1]} : vector<8x378xf32> to vector<8x324xf32>
    %c104 = arith.constant 104 : index
    %c0_27 = arith.constant 0 : index
    %41 = vector.load %arg10[%c104, %c0_27] : memref<216x324xf32, #tpu.memory_space<vmem>>, vector<8x324xf32>
    tpu.vector_store %arg10[%c104, %c0_27], %40 {strides = array<i32>} : memref<216x324xf32, #tpu.memory_space<vmem>>, vector<8x324xf32>,
    %42 = vector.extract_strided_slice %11 {offsets = [0, 20], sizes = [8, 324], strides = [1, 1]} : vector<8x378xf32> to vector<8x324xf32>
    %c112 = arith.constant 112 : index
    %c0_28 = arith.constant 0 : index
    %43 = vector.load %arg10[%c112, %c0_28] : memref<216x324xf32, #tpu.memory_space<vmem>>, vector<8x324xf32>
    tpu.vector_store %arg10[%c112, %c0_28], %42 {strides = array<i32>} : memref<216x324xf32, #tpu.memory_space<vmem>>, vector<8x324xf32>,
    %44 = vector.extract_strided_slice %11 {offsets = [0, 36], sizes = [8, 324], strides = [1, 1]} : vector<8x378xf32> to vector<8x324xf32>
    %c120 = arith.constant 120 : index
    %c0_29 = arith.constant 0 : index
    %45 = vector.load %arg10[%c120, %c0_29] : memref<216x324xf32, #tpu.memory_space<vmem>>, vector<8x324xf32>
    tpu.vector_store %arg10[%c120, %c0_29], %44 {strides = array<i32>} : memref<216x324xf32, #tpu.memory_space<vmem>>, vector<8x324xf32>,
    %46 = vector.extract_strided_slice %11 {offsets = [0, 37], sizes = [8, 324], strides = [1, 1]} : vector<8x378xf32> to vector<8x324xf32>
    %c128 = arith.constant 128 : index
    %c0_30 = arith.constant 0 : index
    %47 = vector.load %arg10[%c128, %c0_30] : memref<216x324xf32, #tpu.memory_space<vmem>>, vector<8x324xf32>
    tpu.vector_store %arg10[%c128, %c0_30], %46 {strides = array<i32>} : memref<216x324xf32, #tpu.memory_space<vmem>>, vector<8x324xf32>,
    %48 = vector.extract_strided_slice %11 {offsets = [0, 38], sizes = [8, 324], strides = [1, 1]} : vector<8x378xf32> to vector<8x324xf32>
    %c136 = arith.constant 136 : index
    %c0_31 = arith.constant 0 : index
    %49 = vector.load %arg10[%c136, %c0_31] : memref<216x324xf32, #tpu.memory_space<vmem>>, vector<8x324xf32>
    tpu.vector_store %arg10[%c136, %c0_31], %48 {strides = array<i32>} : memref<216x324xf32, #tpu.memory_space<vmem>>, vector<8x324xf32>,
    %50 = vector.extract_strided_slice %13 {offsets = [0, 0], sizes = [8, 324], strides = [1, 1]} : vector<8x378xf32> to vector<8x324xf32>
    %c144 = arith.constant 144 : index
    %c0_32 = arith.constant 0 : index
    %51 = vector.load %arg10[%c144, %c0_32] : memref<216x324xf32, #tpu.memory_space<vmem>>, vector<8x324xf32>
    tpu.vector_store %arg10[%c144, %c0_32], %50 {strides = array<i32>} : memref<216x324xf32, #tpu.memory_space<vmem>>, vector<8x324xf32>,
    %52 = vector.extract_strided_slice %13 {offsets = [0, 1], sizes = [8, 324], strides = [1, 1]} : vector<8x378xf32> to vector<8x324xf32>
    %c152 = arith.constant 152 : index
    %c0_33 = arith.constant 0 : index
    %53 = vector.load %arg10[%c152, %c0_33] : memref<216x324xf32, #tpu.memory_space<vmem>>, vector<8x324xf32>
    tpu.vector_store %arg10[%c152, %c0_33], %52 {strides = array<i32>} : memref<216x324xf32, #tpu.memory_space<vmem>>, vector<8x324xf32>,
    %54 = vector.extract_strided_slice %13 {offsets = [0, 2], sizes = [8, 324], strides = [1, 1]} : vector<8x378xf32> to vector<8x324xf32>
    %c160 = arith.constant 160 : index
    %c0_34 = arith.constant 0 : index
    %55 = vector.load %arg10[%c160, %c0_34] : memref<216x324xf32, #tpu.memory_space<vmem>>, vector<8x324xf32>
    tpu.vector_store %arg10[%c160, %c0_34], %54 {strides = array<i32>} : memref<216x324xf32, #tpu.memory_space<vmem>>, vector<8x324xf32>,
    %56 = vector.extract_strided_slice %13 {offsets = [0, 18], sizes = [8, 324], strides = [1, 1]} : vector<8x378xf32> to vector<8x324xf32>
    %c168 = arith.constant 168 : index
    %c0_35 = arith.constant 0 : index
    %57 = vector.load %arg10[%c168, %c0_35] : memref<216x324xf32, #tpu.memory_space<vmem>>, vector<8x324xf32>
    tpu.vector_store %arg10[%c168, %c0_35], %56 {strides = array<i32>} : memref<216x324xf32, #tpu.memory_space<vmem>>, vector<8x324xf32>,
    %58 = vector.extract_strided_slice %13 {offsets = [0, 19], sizes = [8, 324], strides = [1, 1]} : vector<8x378xf32> to vector<8x324xf32>
    %c176 = arith.constant 176 : index
    %c0_36 = arith.constant 0 : index
    %59 = vector.load %arg10[%c176, %c0_36] : memref<216x324xf32, #tpu.memory_space<vmem>>, vector<8x324xf32>
    tpu.vector_store %arg10[%c176, %c0_36], %58 {strides = array<i32>} : memref<216x324xf32, #tpu.memory_space<vmem>>, vector<8x324xf32>,
    %60 = vector.extract_strided_slice %13 {offsets = [0, 20], sizes = [8, 324], strides = [1, 1]} : vector<8x378xf32> to vector<8x324xf32>
    %c184 = arith.constant 184 : index
    %c0_37 = arith.constant 0 : index
    %61 = vector.load %arg10[%c184, %c0_37] : memref<216x324xf32, #tpu.memory_space<vmem>>, vector<8x324xf32>
    tpu.vector_store %arg10[%c184, %c0_37], %60 {strides = array<i32>} : memref<216x324xf32, #tpu.memory_space<vmem>>, vector<8x324xf32>,
    %62 = vector.extract_strided_slice %13 {offsets = [0, 36], sizes = [8, 324], strides = [1, 1]} : vector<8x378xf32> to vector<8x324xf32>
    %c192 = arith.constant 192 : index
    %c0_38 = arith.constant 0 : index
    %63 = vector.load %arg10[%c192, %c0_38] : memref<216x324xf32, #tpu.memory_space<vmem>>, vector<8x324xf32>
    tpu.vector_store %arg10[%c192, %c0_38], %62 {strides = array<i32>} : memref<216x324xf32, #tpu.memory_space<vmem>>, vector<8x324xf32>,
    %64 = vector.extract_strided_slice %13 {offsets = [0, 37], sizes = [8, 324], strides = [1, 1]} : vector<8x378xf32> to vector<8x324xf32>
    %c200 = arith.constant 200 : index
    %c0_39 = arith.constant 0 : index
    %65 = vector.load %arg10[%c200, %c0_39] : memref<216x324xf32, #tpu.memory_space<vmem>>, vector<8x324xf32>
    tpu.vector_store %arg10[%c200, %c0_39], %64 {strides = array<i32>} : memref<216x324xf32, #tpu.memory_space<vmem>>, vector<8x324xf32>,
    %66 = vector.extract_strided_slice %13 {offsets = [0, 38], sizes = [8, 324], strides = [1, 1]} : vector<8x378xf32> to vector<8x324xf32>
    %c208 = arith.constant 208 : index
    %c0_40 = arith.constant 0 : index
    %67 = vector.load %arg10[%c208, %c0_40] : memref<216x324xf32, #tpu.memory_space<vmem>>, vector<8x324xf32>
    tpu.vector_store %arg10[%c208, %c0_40], %66 {strides = array<i32>} : memref<216x324xf32, #tpu.memory_space<vmem>>, vector<8x324xf32>,
    %c0_41 = arith.constant 0 : index
    %c0_42 = arith.constant 0 : index
    %68 = vector.load %arg2[%c0_41, %c0_42] : memref<6x216xf32, #tpu.memory_space<vmem>>, vector<6x216xf32>
    %c0_43 = arith.constant 0 : index
    %c0_44 = arith.constant 0 : index
    %69 = vector.load %arg10[%c0_43, %c0_44] : memref<216x324xf32, #tpu.memory_space<vmem>>, vector<216x324xf32>
    %cst = arith.constant dense<0.000000e+00> : vector<6x324xf32>
    %70 = tpu.matmul %68, %69, %cst {dimension_numbers = #tpu.dot_dimension_numbers<[1], [0], [0], [1], [0, 0, 1, 1], [], []>} : vector<6x216xf32>, vector<216x324xf32>, vector<6x324xf32> -> vector<6x324xf32>
    %c0_45 = arith.constant 0 : index
    %c0_46 = arith.constant 0 : index
    %71 = vector.load %arg3[%c0_45, %c0_46] : memref<6x1xf32, #tpu.memory_space<vmem>>, vector<6x1xf32>
    %72 = vector.broadcast %71 : vector<6x1xf32> to vector<6x324xf32>
    %73 = arith.addf %70, %72 : vector<6x324xf32>
    %c0_47 = arith.constant 0 : index
    %c0_48 = arith.constant 0 : index
    %c0_49 = arith.constant 0 : index
    %c0_50 = arith.constant 0 : index
    %74 = vector.load %arg8[%c0_47, %c0_48, %c0_49, %c0_50] : memref<1x1x6x324xf32, #tpu.memory_space<vmem>>, vector<1x1x6x324xf32>
    %75 = vector.shape_cast %74 : vector<1x1x6x324xf32> to vector<6x324xf32>
    %76 = vector.shape_cast %73 : vector<6x324xf32> to vector<1x1x6x324xf32>
    tpu.vector_store %arg8[%c0_47, %c0_48, %c0_49, %c0_50], %76 {strides = array<i32>} : memref<1x1x6x324xf32, #tpu.memory_space<vmem>>, vector<1x1x6x324xf32>,
    %c0_51 = arith.constant 0 : index
    %c0_52 = arith.constant 0 : index
    %77 = vector.load %arg4[%c0_51, %c0_52] : memref<1x324xf32, #tpu.memory_space<vmem>>, vector<1x324xf32>
    %78 = vector.broadcast %77 : vector<1x324xf32> to vector<6x324xf32>
    %79 = arith.mulf %73, %78 : vector<6x324xf32>
    %c0_53 = arith.constant 0 : index
    %c0_54 = arith.constant 0 : index
    %80 = vector.load %arg11[%c0_53, %c0_54] : memref<6x1xf32, #tpu.memory_space<vmem>>, vector<6x1xf32>
    %cst_55 = arith.constant dense<0.000000e+00> : vector<6xf32>
    %81 = vector.multi_reduction <add>, %79, %cst_55 [1] : vector<6x324xf32> to vector<6xf32>
    %82 = vector.shape_cast %81 : vector<6xf32> to vector<6x1xf32>
    %83 = arith.addf %80, %82 : vector<6x1xf32>
    %c0_56 = arith.constant 0 : index
    %c0_57 = arith.constant 0 : index
    %84 = vector.load %arg11[%c0_56, %c0_57] : memref<6x1xf32, #tpu.memory_space<vmem>>, vector<6x1xf32>
    tpu.vector_store %arg11[%c0_56, %c0_57], %83 {strides = array<i32>} : memref<6x1xf32, #tpu.memory_space<vmem>>, vector<6x1xf32>,
    %c0_58 = arith.constant 0 : index
    %c0_59 = arith.constant 0 : index
    %85 = vector.load %arg12[%c0_58, %c0_59] : memref<6x1xf32, #tpu.memory_space<vmem>>, vector<6x1xf32>
    %86 = arith.mulf %79, %73 : vector<6x324xf32>
    %cst_60 = arith.constant dense<0.000000e+00> : vector<6xf32>
    %87 = vector.multi_reduction <add>, %86, %cst_60 [1] : vector<6x324xf32> to vector<6xf32>
    %88 = vector.shape_cast %87 : vector<6xf32> to vector<6x1xf32>
    %89 = arith.addf %85, %88 : vector<6x1xf32>
    %c0_61 = arith.constant 0 : index
    %c0_62 = arith.constant 0 : index
    %90 = vector.load %arg12[%c0_61, %c0_62] : memref<6x1xf32, #tpu.memory_space<vmem>>, vector<6x1xf32>
    tpu.vector_store %arg12[%c0_61, %c0_62], %89 {strides = array<i32>} : memref<6x1xf32, #tpu.memory_space<vmem>>, vector<6x1xf32>,
    %91 = arith.extui %5 : i1 to i32
    %c0_i32_63 = arith.constant 0 : i32
    %92 = arith.cmpi ne, %91, %c0_i32_63 : i32
    scf.if %92 {
      %c0_64 = arith.constant 0 : index
      %c0_65 = arith.constant 0 : index
      %93 = vector.load %arg11[%c0_64, %c0_65] : memref<6x1xf32, #tpu.memory_space<vmem>>, vector<6x1xf32>
      %cst_66 = arith.constant 1.22070313E-4 : f32
      %94 = vector.broadcast %cst_66 : f32 to vector<6x1xf32>
      %95 = arith.mulf %93, %94 : vector<6x1xf32>
      %c0_67 = arith.constant 0 : index
      %c0_68 = arith.constant 0 : index
      %96 = vector.load %arg12[%c0_67, %c0_68] : memref<6x1xf32, #tpu.memory_space<vmem>>, vector<6x1xf32>
      %cst_69 = arith.constant 1.22070313E-4 : f32
      %97 = vector.broadcast %cst_69 : f32 to vector<6x1xf32>
      %98 = arith.mulf %96, %97 : vector<6x1xf32>
      %99 = arith.mulf %95, %95 : vector<6x1xf32>
      %100 = arith.subf %98, %99 : vector<6x1xf32>
      %cst_70 = arith.constant 9.99999974E-6 : f32
      %101 = vector.broadcast %cst_70 : f32 to vector<6x1xf32>
      %102 = arith.addf %100, %101 : vector<6x1xf32>
      %103 = math.rsqrt %102 : vector<6x1xf32>
      %c0_71 = arith.constant 0 : index
      %c0_72 = arith.constant 0 : index
      %104 = vector.load %arg9[%c0_71, %c0_72] : memref<6x2xf32, #tpu.memory_space<vmem>>, vector<6x1xf32>
      tpu.vector_store %arg9[%c0_71, %c0_72], %95 {strides = array<i32>} : memref<6x2xf32, #tpu.memory_space<vmem>>, vector<6x1xf32>,
      %c0_73 = arith.constant 0 : index
      %c1 = arith.constant 1 : index
      %105 = vector.load %arg9[%c0_73, %c1] : memref<6x2xf32, #tpu.memory_space<vmem>>, vector<6x1xf32>
      tpu.vector_store %arg9[%c0_73, %c1], %103 {strides = array<i32>} : memref<6x2xf32, #tpu.memory_space<vmem>>, vector<6x1xf32>,
    } else {
    }
    return
  }
  func.func @transform_0(%arg0: i32, %arg1: i32) -> (i32, i32) {
    %c0_i32 = arith.constant 0 : i32
    %c0_i32_0 = arith.constant 0 : i32
    %c0_i32_1 = arith.constant 0 : i32
    return %c0_i32, %c0_i32_0 : i32, i32
  }
  func.func @transform_1(%arg0: i32, %arg1: i32) -> (i32, i32) {
    %c0_i32 = arith.constant 0 : i32
    %c0_i32_0 = arith.constant 0 : i32
    %c0_i32_1 = arith.constant 0 : i32
    return %c0_i32, %c0_i32_0 : i32, i32
  }
  func.func @transform_2(%arg0: i32, %arg1: i32) -> (i32, i32) {
    %c0_i32 = arith.constant 0 : i32
    %c0_i32_0 = arith.constant 0 : i32
    %c0_i32_1 = arith.constant 0 : i32
    return %c0_i32, %c0_i32_0 : i32, i32
  }
  func.func @transform_3(%arg0: i32, %arg1: i32) -> (i32, i32, i32, i32) {
    %c0_i32 = arith.constant 0 : i32
    %c0_i32_0 = arith.constant 0 : i32
    %c0_i32_1 = arith.constant 0 : i32
    return %arg0, %arg1, %c0_i32, %c0_i32_0 : i32, i32, i32, i32
  }
  func.func @transform_4(%arg0: i32, %arg1: i32) -> (i32, i32, i32, i32) {
    %c1_i32 = arith.constant 1 : i32
    %0 = arith.addi %arg1, %c1_i32 : i32
    %c0_i32 = arith.constant 0 : i32
    %c0_i32_0 = arith.constant 0 : i32
    %c0_i32_1 = arith.constant 0 : i32
    return %arg0, %0, %c0_i32, %c0_i32_0 : i32, i32, i32, i32
  }
  func.func @transform_5(%arg0: i32, %arg1: i32) -> (i32, i32, i32, i32) {
    %c2_i32 = arith.constant 2 : i32
    %0 = arith.addi %arg1, %c2_i32 : i32
    %c0_i32 = arith.constant 0 : i32
    %c0_i32_0 = arith.constant 0 : i32
    %c0_i32_1 = arith.constant 0 : i32
    return %arg0, %0, %c0_i32, %c0_i32_0 : i32, i32, i32, i32
  }
  func.func @transform_6(%arg0: i32, %arg1: i32) -> (i32, i32, i32, i32) {
    %c0_i32 = arith.constant 0 : i32
    %c0_i32_0 = arith.constant 0 : i32
    %c0_i32_1 = arith.constant 0 : i32
    return %arg0, %arg1, %c0_i32, %c0_i32_0 : i32, i32, i32, i32
  }
  func.func @transform_7(%arg0: i32, %arg1: i32) -> (i32, i32) {
    %c0_i32 = arith.constant 0 : i32
    %c0_i32_0 = arith.constant 0 : i32
    %c0_i32_1 = arith.constant 0 : i32
    return %c0_i32, %c0_i32_0 : i32, i32
  }
}

module attributes {stable_mosaic.version = 11 : i64} {
  func.func @_bn_relu_kernel(%arg0: i32, %arg1: i32, %arg2: memref<6x2xf32, #tpu.memory_space<vmem>>, %arg3: memref<1x1x6x324xf32, #tpu.memory_space<vmem>>, %arg4: memref<1x1x6x324xf32, #tpu.memory_space<vmem>>) attributes {dimension_semantics = [#tpu.dimension_semantics<parallel>, #tpu.dimension_semantics<parallel>], iteration_bounds = array<i64: 2, 16>, scalar_prefetch = 0 : i64, scratch_operands = 0 : i64, tpu.core_type = #tpu.core_type<tc>, window_params = [{pipeline_mode = #tpu.pipeline_mode<synchronous>, transform_indices = @transform_0, window_bounds = array<i64: 6, 2>}, {transform_indices = @transform_1, window_bounds = array<i64: 1, 1, 6, 324>}, {transform_indices = @transform_2, window_bounds = array<i64: 1, 1, 6, 324>}]} {
    %c0 = arith.constant 0 : index
    %c0_0 = arith.constant 0 : index
    %0 = vector.load %arg2[%c0, %c0_0] : memref<6x2xf32, #tpu.memory_space<vmem>>, vector<6x1xf32>
    %c0_1 = arith.constant 0 : index
    %c1 = arith.constant 1 : index
    %1 = vector.load %arg2[%c0_1, %c1] : memref<6x2xf32, #tpu.memory_space<vmem>>, vector<6x1xf32>
    %c0_2 = arith.constant 0 : index
    %c0_3 = arith.constant 0 : index
    %c0_4 = arith.constant 0 : index
    %c0_5 = arith.constant 0 : index
    %2 = vector.load %arg3[%c0_2, %c0_3, %c0_4, %c0_5] : memref<1x1x6x324xf32, #tpu.memory_space<vmem>>, vector<1x1x6x324xf32>
    %3 = vector.shape_cast %2 : vector<1x1x6x324xf32> to vector<6x324xf32>
    %4 = vector.broadcast %0 : vector<6x1xf32> to vector<6x324xf32>
    %5 = arith.subf %3, %4 : vector<6x324xf32>
    %6 = vector.broadcast %1 : vector<6x1xf32> to vector<6x324xf32>
    %7 = arith.mulf %5, %6 : vector<6x324xf32>
    %cst = arith.constant 0.000000e+00 : f32
    %8 = vector.broadcast %cst : f32 to vector<6x324xf32>
    %9 = arith.maximumf %7, %8 : vector<6x324xf32>
    %c0_6 = arith.constant 0 : index
    %c0_7 = arith.constant 0 : index
    %c0_8 = arith.constant 0 : index
    %c0_9 = arith.constant 0 : index
    %10 = vector.load %arg4[%c0_6, %c0_7, %c0_8, %c0_9] : memref<1x1x6x324xf32, #tpu.memory_space<vmem>>, vector<1x1x6x324xf32>
    %11 = vector.shape_cast %10 : vector<1x1x6x324xf32> to vector<6x324xf32>
    %12 = vector.shape_cast %9 : vector<6x324xf32> to vector<1x1x6x324xf32>
    tpu.vector_store %arg4[%c0_6, %c0_7, %c0_8, %c0_9], %12 {strides = array<i32>} : memref<1x1x6x324xf32, #tpu.memory_space<vmem>>, vector<1x1x6x324xf32>,
    return
  }
  func.func @transform_0(%arg0: i32, %arg1: i32) -> (i32, i32) {
    %c0_i32 = arith.constant 0 : i32
    %c0_i32_0 = arith.constant 0 : i32
    %c0_i32_1 = arith.constant 0 : i32
    return %c0_i32, %c0_i32_0 : i32, i32
  }
  func.func @transform_1(%arg0: i32, %arg1: i32) -> (i32, i32, i32, i32) {
    %c0_i32 = arith.constant 0 : i32
    %c0_i32_0 = arith.constant 0 : i32
    %c0_i32_1 = arith.constant 0 : i32
    return %arg0, %arg1, %c0_i32, %c0_i32_0 : i32, i32, i32, i32
  }
  func.func @transform_2(%arg0: i32, %arg1: i32) -> (i32, i32, i32, i32) {
    %c0_i32 = arith.constant 0 : i32
    %c0_i32_0 = arith.constant 0 : i32
    %c0_i32_1 = arith.constant 0 : i32
    return %arg0, %arg1, %c0_i32, %c0_i32_0 : i32, i32, i32, i32
  }
}

</mosaic_0001>

<llo_original>
// kernel: conv_init_forward.3
$region0: #{conv_init_forward.3}
  #allocation0 [shape = 'u32[]', space=smem, size = 0x4, offset = 0x4, fixed_abs, tag = 'smem constant byte address 0x4 - core index']
  #allocation1 [shape = 'u32[144,128]{1,0:T(1,128)}', space=vmem, size = 0x12000, scoped, tag = 'internal scratch']
  %s0 = inlined_call_operand.vmem [shape: f32[6,2], index: 0, kind: input, shape index: {}]
  %s1 = inlined_call_operand.vmem [shape: f32[2,16,6,324], index: 1, kind: input, shape index: {}]
  %s2 = inlined_call_operand.vmem [shape: f32[2,16,6,324], index: 2, kind: output, shape index: {}]
  %s3 = sld [smem:[#allocation0]]
  $region41: #{conv_init_forward.3} parent=0
    _
  %s5 = ssub.s32 1, %s3
  %s6 = scalar_select 0, %s5, %s3
  loop: start=0, step=1, limit=34
  $region2: #{conv_init_forward.3} parent=0 // loop_pre_header
    _
  $region3: #{conv_init_forward.3} parent=0 // loop_header
    %s8 = sphi 0, %s12
    %p9 = scmp.ge.s32.totalorder %s8, 34
    %s15 = sphi 0, %s27
    %s16 = sphi 0, %s23
    %s17 = sphi 0, %s15
    %s18 = sphi 0, %s16
    %s19 = sphi 0, %s17
    %s20 = sphi 0, %s18
    %s28 = sphi 0, %s28
    %s30 = sphi 0, %s28
    %s31 = sphi 0, %s30
    %s45 = sphi 0, %s31
    %s53 = sphi 0, %s55
    %s56 = sphi 0, %s53
    %s57 = sphi 0, %s56
    %s73 = sphi 0, %s57
    %s81 = sphi 0, %s83
    %s84 = sphi 0, %s81
    %s85 = sphi 0, %s84
    %s101 = sphi 0, %s85
  $region4: #{conv_init_forward.3} parent=0 // loop_header_branch
    %11 = sbr.rel (%p9) target = $region8
  $region5: #{conv_init_forward.3} parent=0 // loop_body
    %s13 = ssub.s32 %s8, 1
    %s14 = ssub.s32 %s8, 2
    %s21 = sadd.s32 1, %s16
    %p22 = scmp.ge.s32.totalorder %s21, 16
    %s23 = scalar_select %p22, 0, %s21
    %s24 = sadd.s32 1, %s15
    %s25 = scalar_select %p22, %s24, %s15
    %p26 = scmp.ge.s32.totalorder %s25, 2
    %s27 = scalar_select %p26, 0, %s25
    %s29 = sadd.s32 %s28, 1
    %p32 = scmp.eq.s32.totalorder %s8, 31
    %p33 = scmp.ne.s32.totalorder %s28, %s30
    %p34 = scmp.eq.s32.totalorder %s8, 0
    %p35 = por %p33, %p34
    %p36 = scmp.ne.s32.totalorder %s28, %s30
    %p37 = scmp.eq.s32.totalorder %s13, 31
    %p38 = por %p36, %p37
    %p39 = scmp.ne.s32.totalorder %s30, %s31
    %p40 = scmp.eq.s32.totalorder %s13, 0
    %p41 = por %p39, %p40
    %p42 = scmp.ne.s32.totalorder %s30, %s31
    %p43 = scmp.eq.s32.totalorder %s14, 31
    %p44 = por %p42, %p43
    %p46 = scmp.ne.s32.totalorder %s31, %s45
    %p47 = scmp.eq.s32.totalorder %s14, 0
    %p48 = por %p46, %p47
    %s49 = ssub.s32 %s15, %s27
    %s50 = ssub.s32 %s16, %s23
    %s51 = sor.u32 %s49, %s50
    %p52 = scmp.eq.s32.totalorder %s51, 0
    %s54 = sadd.s32 %s53, 1
    %s55 = scalar_select %p52, %s53, %s54
    %p58 = pneg %p52
    %p59 = scmp.eq.s32.totalorder %s8, 31
    %p60 = por %p58, %p59
    %p61 = scmp.ne.s32.totalorder %s53, %s56
    %p62 = scmp.eq.s32.totalorder %s8, 0
    %p63 = por %p61, %p62
    %p64 = scmp.ne.s32.totalorder %s53, %s56
    %p65 = scmp.eq.s32.totalorder %s13, 31
    %p66 = por %p64, %p65
    %p67 = scmp.ne.s32.totalorder %s56, %s57
    %p68 = scmp.eq.s32.totalorder %s13, 0
    %p69 = por %p67, %p68
    %p70 = scmp.ne.s32.totalorder %s56, %s57
    %p71 = scmp.eq.s32.totalorder %s14, 31
    %p72 = por %p70, %p71
    %p74 = scmp.ne.s32.totalorder %s57, %s73
    %p75 = scmp.eq.s32.totalorder %s14, 0
    %p76 = por %p74, %p75
    %s77 = ssub.s32 %s15, %s27
    %s78 = ssub.s32 %s16, %s23
    %s79 = sor.u32 %s77, %s78
    %p80 = scmp.eq.s32.totalorder %s79, 0
    %s82 = sadd.s32 %s81, 1
    %s83 = scalar_select %p80, %s81, %s82
    %p86 = pneg %p80
    %p87 = scmp.eq.s32.totalorder %s8, 31
    %p88 = por %p86, %p87
    %p89 = scmp.ne.s32.totalorder %s81, %s84
    %p90 = scmp.eq.s32.totalorder %s8, 0
    %p91 = por %p89, %p90
    %p92 = scmp.ne.s32.totalorder %s81, %s84
    %p93 = scmp.eq.s32.totalorder %s13, 31
    %p94 = por %p92, %p93
    %p95 = scmp.ne.s32.totalorder %s84, %s85
    %p96 = scmp.eq.s32.totalorder %s13, 0
    %p97 = por %p95, %p96
    %p98 = scmp.ne.s32.totalorder %s84, %s85
    %p99 = scmp.eq.s32.totalorder %s14, 31
    %p100 = por %p98, %p99
    %p102 = scmp.ne.s32.totalorder %s85, %s101
    %p103 = scmp.eq.s32.totalorder %s14, 0
    %p104 = por %p102, %p103
    %p105 = scmp.le.s32.totalorder 1, %s8
    %p106 = scmp.lt.s32.totalorder %s8, 33
    %p107 = pnand %p105, %p106
    %p108 = pneg %p107
    // Predicated region
    $region9: #{conv_init_forward.3} parent=5 // pred_check
      _
    $region10: #{conv_init_forward.3} parent=5 // pred_check_branch
      %110 = sbr.rel (%p107) target = $region12
    $region11: #{conv_init_forward.3} parent=5 // pred_region
      %s111 = ssub.s32 %s8, 1
      // Predicated region
      $region13: #{conv_init_forward.3} parent=11 // pred_check
        %p112 = pneg %p41
      $region14: #{conv_init_forward.3} parent=11 // pred_check_branch
        %114 = sbr.rel (%p112) target = $region16
      $region15: #{conv_init_forward.3} parent=11 // pred_region
        _
      $region16: #{conv_init_forward.3} parent=11 // pred_fallthru
        _
    $region12: #{conv_init_forward.3} parent=5 // pred_fallthru
      _
    %p115 = scmp.lt.s32.totalorder %s8, 32
    // Predicated region
    $region17: #{conv_init_forward.3} parent=5 // pred_check
      %p116 = pneg %p115
    $region18: #{conv_init_forward.3} parent=5 // pred_check_branch
      %118 = sbr.rel (%p116) target = $region20
    $region19: #{conv_init_forward.3} parent=5 // pred_region
      // Predicated region
      $region21: #{conv_init_forward.3} parent=19 // pred_check
        %p119 = pneg %p63
      $region22: #{conv_init_forward.3} parent=19 // pred_check_branch
        %121 = sbr.rel (%p119) target = $region24
      $region23: #{conv_init_forward.3} parent=19 // pred_region
        %p122 = scmp.lt.s32.totalorder %s15, 1
        %s123 = scalar_select %p122, %s15, 1
        %p124 = scmp.lt.s32.totalorder %s16, 15
        %s125 = scalar_select %p124, %s16, 15
        %s126 = smul.addr %s125, 3
        %s127 = smul.addr %s123, 48
        %s128 = sadd.s32 %s126, %s127
        %s129 = smul.addr %s128, 8
        %s130 = scalar_lea.vmem %s1, %s129
      $region24: #{conv_init_forward.3} parent=19 // pred_fallthru
        _
    $region20: #{conv_init_forward.3} parent=5 // pred_fallthru
      _
    %p131 = scmp.le.s32.totalorder 1, %s8
    %p132 = scmp.lt.s32.totalorder %s8, 33
    %p133 = pnand %p131, %p132
    %p134 = pneg %p133
    // Predicated region
    $region25: #{conv_init_forward.3} parent=5 // pred_check
      _
    $region26: #{conv_init_forward.3} parent=5 // pred_check_branch
      %136 = sbr.rel (%p133) target = $region28
    $region27: #{conv_init_forward.3} parent=5 // pred_region
      %s137 = ssub.s32 %s8, 1
      %p138 = pneg %p41
      %p139 = pneg %p38
      %p140 = scmp.lt.s32.totalorder %s17, 1
      %s141 = scalar_select %p140, %s17, 1
      %p142 = scmp.lt.s32.totalorder %s18, 15
      %s143 = scalar_select %p142, %s18, 15
      %s144 = smul.addr %s143, 3
      %s145 = smul.addr %s141, 48
      %s146 = sadd.s32 %s144, %s145
      %s147 = smul.addr %s146, 8
      %s148 = scalar_lea.vmem %s1, %s147
      %p149 = pneg %p69
      %p150 = pneg %p66
      %p151 = pneg %p97
      %p152 = pneg %p94
      %p153 = scmp.lt.s32.totalorder %s17, 1
      %s154 = scalar_select %p153, %s17, 1
      %p155 = scmp.lt.s32.totalorder %s18, 15
      %s156 = scalar_select %p155, %s18, 15
      %s157 = smul.addr %s156, 3
      %s158 = smul.addr %s154, 48
      %s159 = sadd.s32 %s157, %s158
      %s160 = smul.addr %s159, 8
      %s161 = scalar_lea.vmem %s2, %s160
      %p162 = scmp.lt.s32.totalorder %s17, 1
      %s163 = scalar_select %p162, %s17, 1
      %p164 = scmp.lt.s32.totalorder %s18, 15
      %s165 = scalar_select %p164, %s18, 15
      %s166 = smul.addr %s165, 3
      %s167 = smul.addr %s163, 48
      %s168 = sadd.s32 %s166, %s167
      %s169 = smul.addr %s168, 8
      %s170 = scalar_lea.vmem %s1, %s169
      %p171 = scmp.lt.s32.totalorder %s17, 1
      %s172 = scalar_select %p171, %s17, 1
      %p173 = scmp.lt.s32.totalorder %s18, 15
      %s174 = scalar_select %p173, %s18, 15
      %s175 = smul.addr %s174, 3
      %s176 = smul.addr %s172, 48
      %s177 = sadd.s32 %s175, %s176
      %s178 = smul.addr %s177, 8
      %s179 = scalar_lea.vmem %s2, %s178
      %v180 = vld [vmem:[%s0] sm:$0x3f]
      %v181 = vld [vmem:[%s170] sm:$0x3f]
      %v182 = vld [vmem:[%s170 + $0x8] sm:$0x3f]
      %v183 = vld [vmem:[%s170 + $0x10] sm:$0x3f]
      %185 = vset.pattern.permute.xlu0 0
      %186 = vperm.xlu0 %185, %v180
      %v187 = vpop.permute.xlu0 %186
      %v189 = vsub.f32 %v181, %v187
      %v190 = vsub.f32 %v182, %v187
      %v191 = vsub.f32 %v183, %v187
      %192 = vset.pattern.permute.xlu0 1
      %193 = vperm.xlu0 %192, %v180
      %v194 = vpop.permute.xlu0 %193
      %v196 = vmul.f32 %v189, %v194
      %v197 = vmul.f32 %v190, %v194
      %v198 = vmul.f32 %v191, %v194
      %v199 = vmax.f32 %v196, 0.0
      %v200 = vmax.f32 %v197, 0.0
      %v201 = vmax.f32 %v198, 0.0
      %202 = vst [vmem:[%s179] sm:$0x3f] %v199
      %203 = vst [vmem:[%s179 + $0x8] sm:$0x3f] %v200
      %vm204 = vcmask 553984
      %205 = vst.msk [vmem:[%s179 + $0x10] sm:$0x3f] %vm204, %v201
      %p206 = scmp.lt.s32.totalorder %s17, 1
      %s207 = scalar_select %p206, %s17, 1
      %p208 = scmp.lt.s32.totalorder %s18, 15
      %s209 = scalar_select %p208, %s18, 15
      %s210 = smul.addr %s209, 3
      %s211 = smul.addr %s207, 48
      %s212 = sadd.s32 %s210, %s211
      %s213 = smul.addr %s212, 8
      %s214 = scalar_lea.vmem %s2, %s213
      // Predicated region
      $region29: #{conv_init_forward.3} parent=27 // pred_check
        %p215 = pneg %p94
      $region30: #{conv_init_forward.3} parent=27 // pred_check_branch
        %217 = sbr.rel (%p215) target = $region32
      $region31: #{conv_init_forward.3} parent=27 // pred_region
        _
      $region32: #{conv_init_forward.3} parent=27 // pred_fallthru
        _
    $region28: #{conv_init_forward.3} parent=5 // pred_fallthru
      _
    %p218 = scmp.le.s32.totalorder 2, %s8
    // Predicated region
    $region33: #{conv_init_forward.3} parent=5 // pred_check
      %p219 = pneg %p218
    $region34: #{conv_init_forward.3} parent=5 // pred_check_branch
      %221 = sbr.rel (%p219) target = $region36
    $region35: #{conv_init_forward.3} parent=5 // pred_region
      %s222 = ssub.s32 %s8, 2
      // Predicated region
      $region37: #{conv_init_forward.3} parent=35 // pred_check
        %p223 = pneg %p100
      $region38: #{conv_init_forward.3} parent=35 // pred_check_branch
        %225 = sbr.rel (%p223) target = $region40
      $region39: #{conv_init_forward.3} parent=35 // pred_region
        %p226 = scmp.lt.s32.totalorder %s19, 1
        %s227 = scalar_select %p226, %s19, 1
        %p228 = scmp.lt.s32.totalorder %s20, 15
        %s229 = scalar_select %p228, %s20, 15
        %s230 = smul.addr %s229, 3
        %s231 = smul.addr %s227, 48
        %s232 = sadd.s32 %s230, %s231
        %s233 = smul.addr %s232, 8
        %s234 = scalar_lea.vmem %s2, %s233
      $region40: #{conv_init_forward.3} parent=35 // pred_fallthru
        _
    $region36: #{conv_init_forward.3} parent=5 // pred_fallthru
      _
  $region6: #{conv_init_forward.3} parent=0 // loop_footer
    %s12 = sadd.s32 1, %s8
  $region7: #{conv_init_forward.3} parent=0 // loop_footer_branch
    %7 = sbr.rel target = $region3
  $region8: #{conv_init_forward.3} parent=0 // loop_exit
    _

// kernel: conv_init_forward.2
$region0: #{conv_init_forward.2}
  #allocation0 [shape = 'u32[]', space=smem, size = 0x4, offset = 0x4, fixed_abs, tag = 'smem constant byte address 0x4 - core index']
  #allocation1 [shape = 'u32[144,128]{1,0:T(1,128)}', space=vmem, size = 0x12000, scoped, tag = 'internal scratch']
  #allocation2 [shape = 'f32[216,324]{1,0:T(8,128)}', space=vmem, size = 0x51000, scoped, tag = 'scratch operand']
  #allocation3 [shape = 'f32[6,1]{1,0:T(8,128)}', space=vmem, size = 0x1000, scoped, tag = 'scratch operand']
  #allocation4 [shape = 'f32[6,1]{1,0:T(8,128)}', space=vmem, size = 0x1000, scoped, tag = 'scratch operand']
  %s0 = inlined_call_operand.vmem [shape: f32[6,216], index: 0, kind: input, shape index: {}]
  %s1 = inlined_call_operand.vmem [shape: f32[6,1], index: 1, kind: input, shape index: {}]
  %s2 = inlined_call_operand.vmem [shape: f32[1,324], index: 2, kind: input, shape index: {}]
  %s3 = inlined_call_operand.vmem [shape: f32[2,18,8,378], index: 3, kind: input, shape index: {}, may-alias: {3,4,5}]
  %s4 = inlined_call_operand.vmem [shape: f32[2,18,8,378], index: 4, kind: input, shape index: {}, may-alias: {3,4,5}]
  %s5 = inlined_call_operand.vmem [shape: f32[2,18,8,378], index: 5, kind: input, shape index: {}, may-alias: {3,4,5}]
  %s6 = inlined_call_operand.vmem [shape: f32[2,16,6,324], index: 6, kind: output, shape index: {0}]
  %s7 = inlined_call_operand.vmem [shape: f32[6,2], index: 7, kind: output, shape index: {1}]
  %8 = xla_tuple %s6, %s7
  %s9 = sld [smem:[#allocation0]]
  $region73: #{conv_init_forward.2} parent=0
    _
  %s11 = ssub.s32 1, %s9
  %s12 = scalar_select 0, %s11, %s9
  loop: start=0, step=1, limit=34
  $region2: #{conv_init_forward.2} parent=0 // loop_pre_header
    _
  $region3: #{conv_init_forward.2} parent=0 // loop_header
    %s14 = sphi 0, %s18
    %p15 = scmp.ge.s32.totalorder %s14, 34
    %s21 = sphi 0, %s33
    %s22 = sphi 0, %s29
    %s23 = sphi 0, %s21
    %s24 = sphi 0, %s22
    %s25 = sphi 0, %s23
    %s26 = sphi 0, %s24
    %s34 = sphi 0, %s34
    %s36 = sphi 0, %s34
    %s37 = sphi 0, %s36
    %s51 = sphi 0, %s37
    %s55 = sphi 0, %s55
    %s57 = sphi 0, %s55
    %s58 = sphi 0, %s57
    %s72 = sphi 0, %s58
    %s76 = sphi 0, %s76
    %s78 = sphi 0, %s76
    %s79 = sphi 0, %s78
    %s93 = sphi 0, %s79
    %s101 = sphi 0, %s103
    %s104 = sphi 0, %s101
    %s105 = sphi 0, %s104
    %s121 = sphi 0, %s105
    %s131 = sphi 0, %s133
    %s134 = sphi 0, %s131
    %s135 = sphi 0, %s134
    %s151 = sphi 0, %s135
    %s161 = sphi 0, %s163
    %s164 = sphi 0, %s161
    %s165 = sphi 0, %s164
    %s181 = sphi 0, %s165
    %s189 = sphi 0, %s191
    %s192 = sphi 0, %s189
    %s193 = sphi 0, %s192
    %s209 = sphi 0, %s193
    %s213 = sphi 0, %s213
    %s215 = sphi 0, %s213
    %s216 = sphi 0, %s215
    %s230 = sphi 0, %s216
  $region4: #{conv_init_forward.2} parent=0 // loop_header_branch
    %17 = sbr.rel (%p15) target = $region8
  $region5: #{conv_init_forward.2} parent=0 // loop_body
    %s19 = ssub.s32 %s14, 1
    %s20 = ssub.s32 %s14, 2
    %s27 = sadd.s32 1, %s22
    %p28 = scmp.ge.s32.totalorder %s27, 16
    %s29 = scalar_select %p28, 0, %s27
    %s30 = sadd.s32 1, %s21
    %s31 = scalar_select %p28, %s30, %s21
    %p32 = scmp.ge.s32.totalorder %s31, 2
    %s33 = scalar_select %p32, 0, %s31
    %s35 = sadd.s32 %s34, 1
    %p38 = scmp.eq.s32.totalorder %s14, 31
    %p39 = scmp.ne.s32.totalorder %s34, %s36
    %p40 = scmp.eq.s32.totalorder %s14, 0
    %p41 = por %p39, %p40
    %p42 = scmp.ne.s32.totalorder %s34, %s36
    %p43 = scmp.eq.s32.totalorder %s19, 31
    %p44 = por %p42, %p43
    %p45 = scmp.ne.s32.totalorder %s36, %s37
    %p46 = scmp.eq.s32.totalorder %s19, 0
    %p47 = por %p45, %p46
    %p48 = scmp.ne.s32.totalorder %s36, %s37
    %p49 = scmp.eq.s32.totalorder %s20, 31
    %p50 = por %p48, %p49
    %p52 = scmp.ne.s32.totalorder %s37, %s51
    %p53 = scmp.eq.s32.totalorder %s20, 0
    %p54 = por %p52, %p53
    %s56 = sadd.s32 %s55, 1
    %p59 = scmp.eq.s32.totalorder %s14, 31
    %p60 = scmp.ne.s32.totalorder %s55, %s57
    %p61 = scmp.eq.s32.totalorder %s14, 0
    %p62 = por %p60, %p61
    %p63 = scmp.ne.s32.totalorder %s55, %s57
    %p64 = scmp.eq.s32.totalorder %s19, 31
    %p65 = por %p63, %p64
    %p66 = scmp.ne.s32.totalorder %s57, %s58
    %p67 = scmp.eq.s32.totalorder %s19, 0
    %p68 = por %p66, %p67
    %p69 = scmp.ne.s32.totalorder %s57, %s58
    %p70 = scmp.eq.s32.totalorder %s20, 31
    %p71 = por %p69, %p70
    %p73 = scmp.ne.s32.totalorder %s58, %s72
    %p74 = scmp.eq.s32.totalorder %s20, 0
    %p75 = por %p73, %p74
    %s77 = sadd.s32 %s76, 1
    %p80 = scmp.eq.s32.totalorder %s14, 31
    %p81 = scmp.ne.s32.totalorder %s76, %s78
    %p82 = scmp.eq.s32.totalorder %s14, 0
    %p83 = por %p81, %p82
    %p84 = scmp.ne.s32.totalorder %s76, %s78
    %p85 = scmp.eq.s32.totalorder %s19, 31
    %p86 = por %p84, %p85
    %p87 = scmp.ne.s32.totalorder %s78, %s79
    %p88 = scmp.eq.s32.totalorder %s19, 0
    %p89 = por %p87, %p88
    %p90 = scmp.ne.s32.totalorder %s78, %s79
    %p91 = scmp.eq.s32.totalorder %s20, 31
    %p92 = por %p90, %p91
    %p94 = scmp.ne.s32.totalorder %s79, %s93
    %p95 = scmp.eq.s32.totalorder %s20, 0
    %p96 = por %p94, %p95
    %s97 = ssub.s32 %s21, %s33
    %s98 = ssub.s32 %s22, %s29
    %s99 = sor.u32 %s97, %s98
    %p100 = scmp.eq.s32.totalorder %s99, 0
    %s102 = sadd.s32 %s101, 1
    %s103 = scalar_select %p100, %s101, %s102
    %p106 = pneg %p100
    %p107 = scmp.eq.s32.totalorder %s14, 31
    %p108 = por %p106, %p107
    %p109 = scmp.ne.s32.totalorder %s101, %s104
    %p110 = scmp.eq.s32.totalorder %s14, 0
    %p111 = por %p109, %p110
    %p112 = scmp.ne.s32.totalorder %s101, %s104
    %p113 = scmp.eq.s32.totalorder %s19, 31
    %p114 = por %p112, %p113
    %p115 = scmp.ne.s32.totalorder %s104, %s105
    %p116 = scmp.eq.s32.totalorder %s19, 0
    %p117 = por %p115, %p116
    %p118 = scmp.ne.s32.totalorder %s104, %s105
    %p119 = scmp.eq.s32.totalorder %s20, 31
    %p120 = por %p118, %p119
    %p122 = scmp.ne.s32.totalorder %s105, %s121
    %p123 = scmp.eq.s32.totalorder %s20, 0
    %p124 = por %p122, %p123
    %s125 = sadd.s32 %s22, 1
    %s126 = sadd.s32 %s29, 1
    %s127 = ssub.s32 %s21, %s33
    %s128 = ssub.s32 %s125, %s126
    %s129 = sor.u32 %s127, %s128
    %p130 = scmp.eq.s32.totalorder %s129, 0
    %s132 = sadd.s32 %s131, 1
    %s133 = scalar_select %p130, %s131, %s132
    %p136 = pneg %p130
    %p137 = scmp.eq.s32.totalorder %s14, 31
    %p138 = por %p136, %p137
    %p139 = scmp.ne.s32.totalorder %s131, %s134
    %p140 = scmp.eq.s32.totalorder %s14, 0
    %p141 = por %p139, %p140
    %p142 = scmp.ne.s32.totalorder %s131, %s134
    %p143 = scmp.eq.s32.totalorder %s19, 31
    %p144 = por %p142, %p143
    %p145 = scmp.ne.s32.totalorder %s134, %s135
    %p146 = scmp.eq.s32.totalorder %s19, 0
    %p147 = por %p145, %p146
    %p148 = scmp.ne.s32.totalorder %s134, %s135
    %p149 = scmp.eq.s32.totalorder %s20, 31
    %p150 = por %p148, %p149
    %p152 = scmp.ne.s32.totalorder %s135, %s151
    %p153 = scmp.eq.s32.totalorder %s20, 0
    %p154 = por %p152, %p153
    %s155 = sadd.s32 %s22, 2
    %s156 = sadd.s32 %s29, 2
    %s157 = ssub.s32 %s21, %s33
    %s158 = ssub.s32 %s155, %s156
    %s159 = sor.u32 %s157, %s158
    %p160 = scmp.eq.s32.totalorder %s159, 0
    %s162 = sadd.s32 %s161, 1
    %s163 = scalar_select %p160, %s161, %s162
    %p166 = pneg %p160
    %p167 = scmp.eq.s32.totalorder %s14, 31
    %p168 = por %p166, %p167
    %p169 = scmp.ne.s32.totalorder %s161, %s164
    %p170 = scmp.eq.s32.totalorder %s14, 0
    %p171 = por %p169, %p170
    %p172 = scmp.ne.s32.totalorder %s161, %s164
    %p173 = scmp.eq.s32.totalorder %s19, 31
    %p174 = por %p172, %p173
    %p175 = scmp.ne.s32.totalorder %s164, %s165
    %p176 = scmp.eq.s32.totalorder %s19, 0
    %p177 = por %p175, %p176
    %p178 = scmp.ne.s32.totalorder %s164, %s165
    %p179 = scmp.eq.s32.totalorder %s20, 31
    %p180 = por %p178, %p179
    %p182 = scmp.ne.s32.totalorder %s165, %s181
    %p183 = scmp.eq.s32.totalorder %s20, 0
    %p184 = por %p182, %p183
    %s185 = ssub.s32 %s21, %s33
    %s186 = ssub.s32 %s22, %s29
    %s187 = sor.u32 %s185, %s186
    %p188 = scmp.eq.s32.totalorder %s187, 0
    %s190 = sadd.s32 %s189, 1
    %s191 = scalar_select %p188, %s189, %s190
    %p194 = pneg %p188
    %p195 = scmp.eq.s32.totalorder %s14, 31
    %p196 = por %p194, %p195
    %p197 = scmp.ne.s32.totalorder %s189, %s192
    %p198 = scmp.eq.s32.totalorder %s14, 0
    %p199 = por %p197, %p198
    %p200 = scmp.ne.s32.totalorder %s189, %s192
    %p201 = scmp.eq.s32.totalorder %s19, 31
    %p202 = por %p200, %p201
    %p203 = scmp.ne.s32.totalorder %s192, %s193
    %p204 = scmp.eq.s32.totalorder %s19, 0
    %p205 = por %p203, %p204
    %p206 = scmp.ne.s32.totalorder %s192, %s193
    %p207 = scmp.eq.s32.totalorder %s20, 31
    %p208 = por %p206, %p207
    %p210 = scmp.ne.s32.totalorder %s193, %s209
    %p211 = scmp.eq.s32.totalorder %s20, 0
    %p212 = por %p210, %p211
    %s214 = sadd.s32 %s213, 1
    %p217 = scmp.eq.s32.totalorder %s14, 31
    %p218 = scmp.ne.s32.totalorder %s213, %s215
    %p219 = scmp.eq.s32.totalorder %s14, 0
    %p220 = por %p218, %p219
    %p221 = scmp.ne.s32.totalorder %s213, %s215
    %p222 = scmp.eq.s32.totalorder %s19, 31
    %p223 = por %p221, %p222
    %p224 = scmp.ne.s32.totalorder %s215, %s216
    %p225 = scmp.eq.s32.totalorder %s19, 0
    %p226 = por %p224, %p225
    %p227 = scmp.ne.s32.totalorder %s215, %s216
    %p228 = scmp.eq.s32.totalorder %s20, 31
    %p229 = por %p227, %p228
    %p231 = scmp.ne.s32.totalorder %s216, %s230
    %p232 = scmp.eq.s32.totalorder %s20, 0
    %p233 = por %p231, %p232
    %p234 = scmp.le.s32.totalorder 1, %s14
    %p235 = scmp.lt.s32.totalorder %s14, 33
    %p236 = pnand %p234, %p235
    %p237 = pneg %p236
    // Predicated region
    $region9: #{conv_init_forward.2} parent=5 // pred_check
      _
    $region10: #{conv_init_forward.2} parent=5 // pred_check_branch
      %239 = sbr.rel (%p236) target = $region12
    $region11: #{conv_init_forward.2} parent=5 // pred_region
      %s240 = ssub.s32 %s14, 1
      // Predicated region
      $region13: #{conv_init_forward.2} parent=11 // pred_check
        %p241 = pneg %p47
      $region14: #{conv_init_forward.2} parent=11 // pred_check_branch
        %243 = sbr.rel (%p241) target = $region16
      $region15: #{conv_init_forward.2} parent=11 // pred_region
        _
      $region16: #{conv_init_forward.2} parent=11 // pred_fallthru
        _
      // Predicated region
      $region17: #{conv_init_forward.2} parent=11 // pred_check
        %p244 = pneg %p68
      $region18: #{conv_init_forward.2} parent=11 // pred_check_branch
        %246 = sbr.rel (%p244) target = $region20
      $region19: #{conv_init_forward.2} parent=11 // pred_region
        _
      $region20: #{conv_init_forward.2} parent=11 // pred_fallthru
        _
      // Predicated region
      $region21: #{conv_init_forward.2} parent=11 // pred_check
        %p247 = pneg %p89
      $region22: #{conv_init_forward.2} parent=11 // pred_check_branch
        %249 = sbr.rel (%p247) target = $region24
      $region23: #{conv_init_forward.2} parent=11 // pred_region
        _
      $region24: #{conv_init_forward.2} parent=11 // pred_fallthru
        _
    $region12: #{conv_init_forward.2} parent=5 // pred_fallthru
      _
    %p250 = scmp.lt.s32.totalorder %s14, 32
    // Predicated region
    $region25: #{conv_init_forward.2} parent=5 // pred_check
      %p251 = pneg %p250
    $region26: #{conv_init_forward.2} parent=5 // pred_check_branch
      %253 = sbr.rel (%p251) target = $region28
    $region27: #{conv_init_forward.2} parent=5 // pred_region
      // Predicated region
      $region29: #{conv_init_forward.2} parent=27 // pred_check
        %p254 = pneg %p111
      $region30: #{conv_init_forward.2} parent=27 // pred_check_branch
        %256 = sbr.rel (%p254) target = $region32
      $region31: #{conv_init_forward.2} parent=27 // pred_region
        %p257 = scmp.lt.s32.totalorder %s21, 1
        %s258 = scalar_select %p257, %s21, 1
        %p259 = scmp.lt.s32.totalorder %s22, 17
        %s260 = scalar_select %p259, %s22, 17
        %s261 = smul.addr %s260, 3
        %s262 = smul.addr %s258, 54
        %s263 = sadd.s32 %s261, %s262
        %s264 = smul.addr %s263, 8
        %s265 = scalar_lea.vmem %s3, %s264
      $region32: #{conv_init_forward.2} parent=27 // pred_fallthru
        _
      // Predicated region
      $region33: #{conv_init_forward.2} parent=27 // pred_check
        %p266 = pneg %p141
      $region34: #{conv_init_forward.2} parent=27 // pred_check_branch
        %268 = sbr.rel (%p266) target = $region36
      $region35: #{conv_init_forward.2} parent=27 // pred_region
        %s269 = sadd.s32 %s22, 1
        %p270 = scmp.lt.s32.totalorder %s21, 1
        %s271 = scalar_select %p270, %s21, 1
        %p272 = scmp.lt.s32.totalorder %s269, 17
        %s273 = scalar_select %p272, %s269, 17
        %s274 = smul.addr %s273, 3
        %s275 = smul.addr %s271, 54
        %s276 = sadd.s32 %s274, %s275
        %s277 = smul.addr %s276, 8
        %s278 = scalar_lea.vmem %s4, %s277
        %s279 = sadd.s32 %s22, 1
      $region36: #{conv_init_forward.2} parent=27 // pred_fallthru
        _
      // Predicated region
      $region37: #{conv_init_forward.2} parent=27 // pred_check
        %p280 = pneg %p171
      $region38: #{conv_init_forward.2} parent=27 // pred_check_branch
        %282 = sbr.rel (%p280) target = $region40
      $region39: #{conv_init_forward.2} parent=27 // pred_region
        %s283 = sadd.s32 %s22, 2
        %p284 = scmp.lt.s32.totalorder %s21, 1
        %s285 = scalar_select %p284, %s21, 1
        %p286 = scmp.lt.s32.totalorder %s283, 17
        %s287 = scalar_select %p286, %s283, 17
        %s288 = smul.addr %s287, 3
        %s289 = smul.addr %s285, 54
        %s290 = sadd.s32 %s288, %s289
        %s291 = smul.addr %s290, 8
        %s292 = scalar_lea.vmem %s5, %s291
        %s293 = sadd.s32 %s22, 2
      $region40: #{conv_init_forward.2} parent=27 // pred_fallthru
        _
    $region28: #{conv_init_forward.2} parent=5 // pred_fallthru
      _
    %p294 = scmp.le.s32.totalorder 1, %s14
    %p295 = scmp.lt.s32.totalorder %s14, 33
    %p296 = pnand %p294, %p295
    %p297 = pneg %p296
    // Predicated region
    $region41: #{conv_init_forward.2} parent=5 // pred_check
      _
    $region42: #{conv_init_forward.2} parent=5 // pred_check_branch
      %299 = sbr.rel (%p296) target = $region44
    $region43: #{conv_init_forward.2} parent=5 // pred_region
      %s300 = ssub.s32 %s14, 1
      %p301 = pneg %p47
      %p302 = pneg %p44
      %p303 = pneg %p68
      %p304 = pneg %p65
      %p305 = pneg %p89
      %p306 = pneg %p86
      %p307 = scmp.lt.s32.totalorder %s23, 1
      %s308 = scalar_select %p307, %s23, 1
      %p309 = scmp.lt.s32.totalorder %s24, 17
      %s310 = scalar_select %p309, %s24, 17
      %s311 = smul.addr %s310, 3
      %s312 = smul.addr %s308, 54
      %s313 = sadd.s32 %s311, %s312
      %s314 = smul.addr %s313, 8
      %s315 = scalar_lea.vmem %s3, %s314
      %p316 = pneg %p117
      %p317 = pneg %p114
      %s318 = sadd.s32 %s24, 1
      %p319 = scmp.lt.s32.totalorder %s23, 1
      %s320 = scalar_select %p319, %s23, 1
      %p321 = scmp.lt.s32.totalorder %s318, 17
      %s322 = scalar_select %p321, %s318, 17
      %s323 = smul.addr %s322, 3
      %s324 = smul.addr %s320, 54
      %s325 = sadd.s32 %s323, %s324
      %s326 = smul.addr %s325, 8
      %s327 = scalar_lea.vmem %s4, %s326
      %p328 = pneg %p147
      %p329 = pneg %p144
      %s330 = sadd.s32 %s24, 2
      %p331 = scmp.lt.s32.totalorder %s23, 1
      %s332 = scalar_select %p331, %s23, 1
      %p333 = scmp.lt.s32.totalorder %s330, 17
      %s334 = scalar_select %p333, %s330, 17
      %s335 = smul.addr %s334, 3
      %s336 = smul.addr %s332, 54
      %s337 = sadd.s32 %s335, %s336
      %s338 = smul.addr %s337, 8
      %s339 = scalar_lea.vmem %s5, %s338
      %p340 = pneg %p177
      %p341 = pneg %p174
      %p342 = pneg %p205
      %p343 = pneg %p202
      %p344 = scmp.lt.s32.totalorder %s23, 1
      %s345 = scalar_select %p344, %s23, 1
      %p346 = scmp.lt.s32.totalorder %s24, 15
      %s347 = scalar_select %p346, %s24, 15
      %s348 = smul.addr %s347, 3
      %s349 = smul.addr %s345, 48
      %s350 = sadd.s32 %s348, %s349
      %s351 = smul.addr %s350, 8
      %s352 = scalar_lea.vmem %s6, %s351
      %p353 = pneg %p226
      %p354 = pneg %p223
      %p355 = scmp.lt.s32.totalorder %s23, 1
      %s356 = scalar_select %p355, %s23, 1
      %p357 = scmp.lt.s32.totalorder %s24, 17
      %s358 = scalar_select %p357, %s24, 17
      %s359 = smul.addr %s358, 3
      %s360 = smul.addr %s356, 54
      %s361 = sadd.s32 %s359, %s360
      %s362 = smul.addr %s361, 8
      %s363 = scalar_lea.vmem %s3, %s362
      %s364 = sadd.s32 %s24, 1
      %p365 = scmp.lt.s32.totalorder %s23, 1
      %s366 = scalar_select %p365, %s23, 1
      %p367 = scmp.lt.s32.totalorder %s364, 17
      %s368 = scalar_select %p367, %s364, 17
      %s369 = smul.addr %s368, 3
      %s370 = smul.addr %s366, 54
      %s371 = sadd.s32 %s369, %s370
      %s372 = smul.addr %s371, 8
      %s373 = scalar_lea.vmem %s4, %s372
      %s374 = sadd.s32 %s24, 1
      %s375 = sadd.s32 %s24, 2
      %p376 = scmp.lt.s32.totalorder %s23, 1
      %s377 = scalar_select %p376, %s23, 1
      %p378 = scmp.lt.s32.totalorder %s375, 17
      %s379 = scalar_select %p378, %s375, 17
      %s380 = smul.addr %s379, 3
      %s381 = smul.addr %s377, 54
      %s382 = sadd.s32 %s380, %s381
      %s383 = smul.addr %s382, 8
      %s384 = scalar_lea.vmem %s5, %s383
      %s385 = sadd.s32 %s24, 2
      %p386 = scmp.lt.s32.totalorder %s23, 1
      %s387 = scalar_select %p386, %s23, 1
      %p388 = scmp.lt.s32.totalorder %s24, 15
      %s389 = scalar_select %p388, %s24, 15
      %s390 = smul.addr %s389, 3
      %s391 = smul.addr %s387, 48
      %s392 = sadd.s32 %s390, %s391
      %s393 = smul.addr %s392, 8
      %s394 = scalar_lea.vmem %s6, %s393
      %p395 = scmp.eq.s32.totalorder %s23, 0
      %p396 = scmp.eq.s32.totalorder %s24, 0
      %p397 = pnand %p395, %p396
      %p398 = pneg %p397
      %p399 = scmp.eq.s32.totalorder %s23, 1
      %p400 = scmp.eq.s32.totalorder %s24, 15
      %p401 = pnand %p399, %p400
      %p402 = pneg %p401
      // Predicated region
      $region45: #{conv_init_forward.2} parent=43 // pred_check
        _
      $region46: #{conv_init_forward.2} parent=43 // pred_check_branch
        %404 = sbr.rel (%p397) target = $region48
      $region47: #{conv_init_forward.2} parent=43 // pred_region
        %vm405 = vcmask 5120
        %406 = vst.msk [vmem:[#allocation3] sm:$0x3f] %vm405, 0.0
        %407 = vst.msk [vmem:[#allocation4] sm:$0x3f] %vm405, 0.0
      $region48: #{conv_init_forward.2} parent=43 // pred_fallthru
        _
      %v408 = vld [vmem:[%s363] sm:$0xff]
      %v409 = vld [vmem:[%s363 + $0x8] sm:$0xff]
      %v410 = vld [vmem:[%s363 + $0x10] sm:$0xff]
      %v411 = vld [vmem:[%s373] sm:$0xff]
      %v412 = vld [vmem:[%s373 + $0x8] sm:$0xff]
      %v413 = vld [vmem:[%s373 + $0x10] sm:$0xff]
      %v414 = vld [vmem:[%s384] sm:$0xff]
      %v415 = vld [vmem:[%s384 + $0x8] sm:$0xff]
      %v416 = vld [vmem:[%s384 + $0x10] sm:$0xff]
      %417 = vst [vmem:[#allocation2] sm:$0xff] %v408
      %418 = vst [vmem:[#allocation2 + $0x8] sm:$0xff] %v409
      %vm419 = vcmask 556032
      %420 = vst.msk [vmem:[#allocation2 + $0x10] sm:$0xff] %vm419, %v410
      %424 = vrot.lane.b32.xlu0 %v408, 127
      %v425 = vpop.permute.xlu0 %424
      %426 = vrot.lane.b32.xlu0 %v409, 127
      %v427 = vpop.permute.xlu0 %426
      %428 = vrot.lane.b32.xlu0 %v410, 127
      %v429 = vpop.permute.xlu0 %428
      %vm430 = vcmask 1039360
      %v431 = vsel %vm430, %v425, %v427
      %v432 = vsel %vm430, %v427, %v429
      %436 = vst [vmem:[#allocation2 + $0x18] sm:$0xff] %v431
      %437 = vst [vmem:[#allocation2 + $0x20] sm:$0xff] %v432
      %438 = vst.msk [vmem:[#allocation2 + $0x28] sm:$0xff] %vm419, %v429
      %439 = vrot.lane.b32.xlu0 %v408, 126
      %v440 = vpop.permute.xlu0 %439
      %441 = vrot.lane.b32.xlu0 %v409, 126
      %v442 = vpop.permute.xlu0 %441
      %443 = vrot.lane.b32.xlu0 %v410, 126
      %v444 = vpop.permute.xlu0 %443
      %vm445 = vcmask 1031168
      %v446 = vsel %vm445, %v440, %v442
      %v447 = vsel %vm445, %v442, %v444
      %451 = vst [vmem:[#allocation2 + $0x30] sm:$0xff] %v446
      %452 = vst [vmem:[#allocation2 + $0x38] sm:$0xff] %v447
      %453 = vst.msk [vmem:[#allocation2 + $0x40] sm:$0xff] %vm419, %v444
      %454 = vrot.lane.b32.xlu0 %v408, 110
      %v455 = vpop.permute.xlu0 %454
      %456 = vrot.lane.b32.xlu0 %v409, 110
      %v457 = vpop.permute.xlu0 %456
      %458 = vrot.lane.b32.xlu0 %v410, 110
      %v459 = vpop.permute.xlu0 %458
      %vm460 = vcmask 900096
      %v461 = vsel %vm460, %v455, %v457
      %v462 = vsel %vm460, %v457, %v459
      %466 = vst [vmem:[#allocation2 + $0x48] sm:$0xff] %v461
      %467 = vst [vmem:[#allocation2 + $0x50] sm:$0xff] %v462
      %468 = vst.msk [vmem:[#allocation2 + $0x58] sm:$0xff] %vm419, %v459
      %469 = vrot.lane.b32.xlu0 %v408, 109
      %v470 = vpop.permute.xlu0 %469
      %471 = vrot.lane.b32.xlu0 %v409, 109
      %v472 = vpop.permute.xlu0 %471
      %473 = vrot.lane.b32.xlu0 %v410, 109
      %v474 = vpop.permute.xlu0 %473
      %vm475 = vcmask 891904
      %v476 = vsel %vm475, %v470, %v472
      %v477 = vsel %vm475, %v472, %v474
      %481 = vst [vmem:[#allocation2 + $0x60] sm:$0xff] %v476
      %482 = vst [vmem:[#allocation2 + $0x68] sm:$0xff] %v477
      %483 = vst.msk [vmem:[#allocation2 + $0x70] sm:$0xff] %vm419, %v474
      %484 = vrot.lane.b32.xlu0 %v408, 108
      %v485 = vpop.permute.xlu0 %484
      %486 = vrot.lane.b32.xlu0 %v409, 108
      %v487 = vpop.permute.xlu0 %486
      %488 = vrot.lane.b32.xlu0 %v410, 108
      %v489 = vpop.permute.xlu0 %488
      %vm490 = vcmask 883712
      %v491 = vsel %vm490, %v485, %v487
      %v492 = vsel %vm490, %v487, %v489
      %496 = vst [vmem:[#allocation2 + $0x78] sm:$0xff] %v491
      %497 = vst [vmem:[#allocation2 + $0x80] sm:$0xff] %v492
      %498 = vst.msk [vmem:[#allocation2 + $0x88] sm:$0xff] %vm419, %v489
      %499 = vrot.lane.b32.xlu0 %v408, 92
      %v500 = vpop.permute.xlu0 %499
      %501 = vrot.lane.b32.xlu0 %v409, 92
      %v502 = vpop.permute.xlu0 %501
      %503 = vrot.lane.b32.xlu0 %v410, 92
      %v504 = vpop.permute.xlu0 %503
      %vm505 = vcmask 752640
      %v506 = vsel %vm505, %v500, %v502
      %v507 = vsel %vm505, %v502, %v504
      %511 = vst [vmem:[#allocation2 + $0x90] sm:$0xff] %v506
      %512 = vst [vmem:[#allocation2 + $0x98] sm:$0xff] %v507
      %513 = vst.msk [vmem:[#allocation2 + $0xa0] sm:$0xff] %vm419, %v504
      %514 = vrot.lane.b32.xlu0 %v408, 91
      %v515 = vpop.permute.xlu0 %514
      %516 = vrot.lane.b32.xlu0 %v409, 91
      %v517 = vpop.permute.xlu0 %516
      %518 = vrot.lane.b32.xlu0 %v410, 91
      %v519 = vpop.permute.xlu0 %518
      %vm520 = vcmask 744448
      %v521 = vsel %vm520, %v515, %v517
      %v522 = vsel %vm520, %v517, %v519
      %526 = vst [vmem:[#allocation2 + $0xa8] sm:$0xff] %v521
      %527 = vst [vmem:[#allocation2 + $0xb0] sm:$0xff] %v522
      %528 = vst.msk [vmem:[#allocation2 + $0xb8] sm:$0xff] %vm419, %v519
      %529 = vrot.lane.b32.xlu0 %v408, 90
      %v530 = vpop.permute.xlu0 %529
      %531 = vrot.lane.b32.xlu0 %v409, 90
      %v532 = vpop.permute.xlu0 %531
      %533 = vrot.lane.b32.xlu0 %v410, 90
      %v534 = vpop.permute.xlu0 %533
      %vm535 = vcmask 736256
      %v536 = vsel %vm535, %v530, %v532
      %v537 = vsel %vm535, %v532, %v534
      %541 = vst [vmem:[#allocation2 + $0xc0] sm:$0xff] %v536
      %542 = vst [vmem:[#allocation2 + $0xc8] sm:$0xff] %v537
      %543 = vst.msk [vmem:[#allocation2 + $0xd0] sm:$0xff] %vm419, %v534
      %544 = vst [vmem:[#allocation2 + $0xd8] sm:$0xff] %v411
      %545 = vst [vmem:[#allocation2 + $0xe0] sm:$0xff] %v412
      %546 = vst.msk [vmem:[#allocation2 + $0xe8] sm:$0xff] %vm419, %v413
      %550 = vrot.lane.b32.xlu0 %v411, 127
      %v551 = vpop.permute.xlu0 %550
      %552 = vrot.lane.b32.xlu0 %v412, 127
      %v553 = vpop.permute.xlu0 %552
      %554 = vrot.lane.b32.xlu0 %v413, 127
      %v555 = vpop.permute.xlu0 %554
      %v556 = vsel %vm430, %v551, %v553
      %v557 = vsel %vm430, %v553, %v555
      %561 = vst [vmem:[#allocation2 + $0xf0] sm:$0xff] %v556
      %562 = vst [vmem:[#allocation2 + $0xf8] sm:$0xff] %v557
      %563 = vst.msk [vmem:[#allocation2 + $0x100] sm:$0xff] %vm419, %v555
      %564 = vrot.lane.b32.xlu0 %v411, 126
      %v565 = vpop.permute.xlu0 %564
      %566 = vrot.lane.b32.xlu0 %v412, 126
      %v567 = vpop.permute.xlu0 %566
      %568 = vrot.lane.b32.xlu0 %v413, 126
      %v569 = vpop.permute.xlu0 %568
      %v570 = vsel %vm445, %v565, %v567
      %v571 = vsel %vm445, %v567, %v569
      %575 = vst [vmem:[#allocation2 + $0x108] sm:$0xff] %v570
      %576 = vst [vmem:[#allocation2 + $0x110] sm:$0xff] %v571
      %577 = vst.msk [vmem:[#allocation2 + $0x118] sm:$0xff] %vm419, %v569
      %578 = vrot.lane.b32.xlu0 %v411, 110
      %v579 = vpop.permute.xlu0 %578
      %580 = vrot.lane.b32.xlu0 %v412, 110
      %v581 = vpop.permute.xlu0 %580
      %582 = vrot.lane.b32.xlu0 %v413, 110
      %v583 = vpop.permute.xlu0 %582
      %v584 = vsel %vm460, %v579, %v581
      %v585 = vsel %vm460, %v581, %v583
      %589 = vst [vmem:[#allocation2 + $0x120] sm:$0xff] %v584
      %590 = vst [vmem:[#allocation2 + $0x128] sm:$0xff] %v585
      %591 = vst.msk [vmem:[#allocation2 + $0x130] sm:$0xff] %vm419, %v583
      %592 = vrot.lane.b32.xlu0 %v411, 109
      %v593 = vpop.permute.xlu0 %592
      %594 = vrot.lane.b32.xlu0 %v412, 109
      %v595 = vpop.permute.xlu0 %594
      %596 = vrot.lane.b32.xlu0 %v413, 109
      %v597 = vpop.permute.xlu0 %596
      %v598 = vsel %vm475, %v593, %v595
      %v599 = vsel %vm475, %v595, %v597
      %603 = vst [vmem:[#allocation2 + $0x138] sm:$0xff] %v598
      %604 = vst [vmem:[#allocation2 + $0x140] sm:$0xff] %v599
      %605 = vst.msk [vmem:[#allocation2 + $0x148] sm:$0xff] %vm419, %v597
      %606 = vrot.lane.b32.xlu0 %v411, 108
      %v607 = vpop.permute.xlu0 %606
      %608 = vrot.lane.b32.xlu0 %v412, 108
      %v609 = vpop.permute.xlu0 %608
      %610 = vrot.lane.b32.xlu0 %v413, 108
      %v611 = vpop.permute.xlu0 %610
      %v612 = vsel %vm490, %v607, %v609
      %v613 = vsel %vm490, %v609, %v611
      %617 = vst [vmem:[#allocation2 + $0x150] sm:$0xff] %v612
      %618 = vst [vmem:[#allocation2 + $0x158] sm:$0xff] %v613
      %619 = vst.msk [vmem:[#allocation2 + $0x160] sm:$0xff] %vm419, %v611
      %620 = vrot.lane.b32.xlu0 %v411, 92
      %v621 = vpop.permute.xlu0 %620
      %622 = vrot.lane.b32.xlu0 %v412, 92
      %v623 = vpop.permute.xlu0 %622
      %624 = vrot.lane.b32.xlu0 %v413, 92
      %v625 = vpop.permute.xlu0 %624
      %v626 = vsel %vm505, %v621, %v623
      %v627 = vsel %vm505, %v623, %v625
      %631 = vst [vmem:[#allocation2 + $0x168] sm:$0xff] %v626
      %632 = vst [vmem:[#allocation2 + $0x170] sm:$0xff] %v627
      %633 = vst.msk [vmem:[#allocation2 + $0x178] sm:$0xff] %vm419, %v625
      %634 = vrot.lane.b32.xlu0 %v411, 91
      %v635 = vpop.permute.xlu0 %634
      %636 = vrot.lane.b32.xlu0 %v412, 91
      %v637 = vpop.permute.xlu0 %636
      %638 = vrot.lane.b32.xlu0 %v413, 91
      %v639 = vpop.permute.xlu0 %638
      %v640 = vsel %vm520, %v635, %v637
      %v641 = vsel %vm520, %v637, %v639
      %645 = vst [vmem:[#allocation2 + $0x180] sm:$0xff] %v640
      %646 = vst [vmem:[#allocation2 + $0x188] sm:$0xff] %v641
      %647 = vst.msk [vmem:[#allocation2 + $0x190] sm:$0xff] %vm419, %v639
      %648 = vrot.lane.b32.xlu0 %v411, 90
      %v649 = vpop.permute.xlu0 %648
      %650 = vrot.lane.b32.xlu0 %v412, 90
      %v651 = vpop.permute.xlu0 %650
      %652 = vrot.lane.b32.xlu0 %v413, 90
      %v653 = vpop.permute.xlu0 %652
      %v654 = vsel %vm535, %v649, %v651
      %v655 = vsel %vm535, %v651, %v653
      %659 = vst [vmem:[#allocation2 + $0x198] sm:$0xff] %v654
      %660 = vst [vmem:[#allocation2 + $0x1a0] sm:$0xff] %v655
      %661 = vst.msk [vmem:[#allocation2 + $0x1a8] sm:$0xff] %vm419, %v653
      %662 = vst [vmem:[#allocation2 + $0x1b0] sm:$0xff] %v414
      %663 = vst [vmem:[#allocation2 + $0x1b8] sm:$0xff] %v415
      %664 = vst.msk [vmem:[#allocation2 + $0x1c0] sm:$0xff] %vm419, %v416
      %668 = vrot.lane.b32.xlu0 %v414, 127
      %v669 = vpop.permute.xlu0 %668
      %670 = vrot.lane.b32.xlu0 %v415, 127
      %v671 = vpop.permute.xlu0 %670
      %672 = vrot.lane.b32.xlu0 %v416, 127
      %v673 = vpop.permute.xlu0 %672
      %v674 = vsel %vm430, %v669, %v671
      %v675 = vsel %vm430, %v671, %v673
      %679 = vst [vmem:[#allocation2 + $0x1c8] sm:$0xff] %v674
      %680 = vst [vmem:[#allocation2 + $0x1d0] sm:$0xff] %v675
      %681 = vst.msk [vmem:[#allocation2 + $0x1d8] sm:$0xff] %vm419, %v673
      %682 = vrot.lane.b32.xlu0 %v414, 126
      %v683 = vpop.permute.xlu0 %682
      %684 = vrot.lane.b32.xlu0 %v415, 126
      %v685 = vpop.permute.xlu0 %684
      %686 = vrot.lane.b32.xlu0 %v416, 126
      %v687 = vpop.permute.xlu0 %686
      %v688 = vsel %vm445, %v683, %v685
      %v689 = vsel %vm445, %v685, %v687
      %693 = vst [vmem:[#allocation2 + $0x1e0] sm:$0xff] %v688
      %694 = vst [vmem:[#allocation2 + $0x1e8] sm:$0xff] %v689
      %695 = vst.msk [vmem:[#allocation2 + $0x1f0] sm:$0xff] %vm419, %v687
      %696 = vrot.lane.b32.xlu0 %v414, 110
      %v697 = vpop.permute.xlu0 %696
      %698 = vrot.lane.b32.xlu0 %v415, 110
      %v699 = vpop.permute.xlu0 %698
      %700 = vrot.lane.b32.xlu0 %v416, 110
      %v701 = vpop.permute.xlu0 %700
      %v702 = vsel %vm460, %v697, %v699
      %v703 = vsel %vm460, %v699, %v701
      %707 = vst [vmem:[#allocation2 + $0x1f8] sm:$0xff] %v702
      %708 = vst [vmem:[#allocation2 + $0x200] sm:$0xff] %v703
      %709 = vst.msk [vmem:[#allocation2 + $0x208] sm:$0xff] %vm419, %v701
      %710 = vrot.lane.b32.xlu0 %v414, 109
      %v711 = vpop.permute.xlu0 %710
      %712 = vrot.lane.b32.xlu0 %v415, 109
      %v713 = vpop.permute.xlu0 %712
      %714 = vrot.lane.b32.xlu0 %v416, 109
      %v715 = vpop.permute.xlu0 %714
      %v716 = vsel %vm475, %v711, %v713
      %v717 = vsel %vm475, %v713, %v715
      %721 = vst [vmem:[#allocation2 + $0x210] sm:$0xff] %v716
      %722 = vst [vmem:[#allocation2 + $0x218] sm:$0xff] %v717
      %723 = vst.msk [vmem:[#allocation2 + $0x220] sm:$0xff] %vm419, %v715
      %724 = vrot.lane.b32.xlu0 %v414, 108
      %v725 = vpop.permute.xlu0 %724
      %726 = vrot.lane.b32.xlu0 %v415, 108
      %v727 = vpop.permute.xlu0 %726
      %728 = vrot.lane.b32.xlu0 %v416, 108
      %v729 = vpop.permute.xlu0 %728
      %v730 = vsel %vm490, %v725, %v727
      %v731 = vsel %vm490, %v727, %v729
      %735 = vst [vmem:[#allocation2 + $0x228] sm:$0xff] %v730
      %736 = vst [vmem:[#allocation2 + $0x230] sm:$0xff] %v731
      %737 = vst.msk [vmem:[#allocation2 + $0x238] sm:$0xff] %vm419, %v729
      %738 = vrot.lane.b32.xlu0 %v414, 92
      %v739 = vpop.permute.xlu0 %738
      %740 = vrot.lane.b32.xlu0 %v415, 92
      %v741 = vpop.permute.xlu0 %740
      %742 = vrot.lane.b32.xlu0 %v416, 92
      %v743 = vpop.permute.xlu0 %742
      %v744 = vsel %vm505, %v739, %v741
      %v745 = vsel %vm505, %v741, %v743
      %749 = vst [vmem:[#allocation2 + $0x240] sm:$0xff] %v744
      %750 = vst [vmem:[#allocation2 + $0x248] sm:$0xff] %v745
      %751 = vst.msk [vmem:[#allocation2 + $0x250] sm:$0xff] %vm419, %v743
      %752 = vrot.lane.b32.xlu0 %v414, 91
      %v753 = vpop.permute.xlu0 %752
      %754 = vrot.lane.b32.xlu0 %v415, 91
      %v755 = vpop.permute.xlu0 %754
      %756 = vrot.lane.b32.xlu0 %v416, 91
      %v757 = vpop.permute.xlu0 %756
      %v758 = vsel %vm520, %v753, %v755
      %v759 = vsel %vm520, %v755, %v757
      %763 = vst [vmem:[#allocation2 + $0x258] sm:$0xff] %v758
      %764 = vst [vmem:[#allocation2 + $0x260] sm:$0xff] %v759
      %765 = vst.msk [vmem:[#allocation2 + $0x268] sm:$0xff] %vm419, %v757
      %766 = vrot.lane.b32.xlu0 %v414, 90
      %v767 = vpop.permute.xlu0 %766
      %768 = vrot.lane.b32.xlu0 %v415, 90
      %v769 = vpop.permute.xlu0 %768
      %770 = vrot.lane.b32.xlu0 %v416, 90
      %v771 = vpop.permute.xlu0 %770
      %v772 = vsel %vm535, %v767, %v769
      %v773 = vsel %vm535, %v769, %v771
      %777 = vst [vmem:[#allocation2 + $0x270] sm:$0xff] %v772
      %778 = vst [vmem:[#allocation2 + $0x278] sm:$0xff] %v773
      %779 = vst.msk [vmem:[#allocation2 + $0x280] sm:$0xff] %vm419, %v771
      %v780 = vld [vmem:[%s0] sm:$0x3f]
      %v781 = vld [vmem:[%s0 + $0x8] sm:$0x3f]
      %v782 = vld [vmem:[#allocation2] sm:$0xff]
      %v783 = vld [vmem:[#allocation2 + $0x8] sm:$0xff]
      %v784 = vld [vmem:[#allocation2 + $0x10] sm:$0xff]
      %v785 = vld [vmem:[#allocation2 + $0x18] sm:$0xff]
      %v786 = vld [vmem:[#allocation2 + $0x20] sm:$0xff]
      %v787 = vld [vmem:[#allocation2 + $0x28] sm:$0xff]
      %v788 = vld [vmem:[#allocation2 + $0x30] sm:$0xff]
      %v789 = vld [vmem:[#allocation2 + $0x38] sm:$0xff]
      %v790 = vld [vmem:[#allocation2 + $0x40] sm:$0xff]
      %v791 = vld [vmem:[#allocation2 + $0x48] sm:$0xff]
      %v792 = vld [vmem:[#allocation2 + $0x50] sm:$0xff]
      %v793 = vld [vmem:[#allocation2 + $0x58] sm:$0xff]
      %v794 = vld [vmem:[#allocation2 + $0x60] sm:$0xff]
      %v795 = vld [vmem:[#allocation2 + $0x68] sm:$0xff]
      %v796 = vld [vmem:[#allocation2 + $0x70] sm:$0xff]
      %v797 = vld [vmem:[#allocation2 + $0x78] sm:$0xff]
      %v798 = vld [vmem:[#allocation2 + $0x80] sm:$0xff]
      %v799 = vld [vmem:[#allocation2 + $0x88] sm:$0xff]
      %v800 = vld [vmem:[#allocation2 + $0x90] sm:$0xff]
      %v801 = vld [vmem:[#allocation2 + $0x98] sm:$0xff]
      %v802 = vld [vmem:[#allocation2 + $0xa0] sm:$0xff]
      %v803 = vld [vmem:[#allocation2 + $0xa8] sm:$0xff]
      %v804 = vld [vmem:[#allocation2 + $0xb0] sm:$0xff]
      %v805 = vld [vmem:[#allocation2 + $0xb8] sm:$0xff]
      %v806 = vld [vmem:[#allocation2 + $0xc0] sm:$0xff]
      %v807 = vld [vmem:[#allocation2 + $0xc8] sm:$0xff]
      %v808 = vld [vmem:[#allocation2 + $0xd0] sm:$0xff]
      %v809 = vld [vmem:[#allocation2 + $0xd8] sm:$0xff]
      %v810 = vld [vmem:[#allocation2 + $0xe0] sm:$0xff]
      %v811 = vld [vmem:[#allocation2 + $0xe8] sm:$0xff]
      %v812 = vld [vmem:[#allocation2 + $0xf0] sm:$0xff]
      %v813 = vld [vmem:[#allocation2 + $0xf8] sm:$0xff]
      %v814 = vld [vmem:[#allocation2 + $0x100] sm:$0xff]
      %v815 = vld [vmem:[#allocation2 + $0x108] sm:$0xff]
      %v816 = vld [vmem:[#allocation2 + $0x110] sm:$0xff]
      %v817 = vld [vmem:[#allocation2 + $0x118] sm:$0xff]
      %v818 = vld [vmem:[#allocation2 + $0x120] sm:$0xff]
      %v819 = vld [vmem:[#allocation2 + $0x128] sm:$0xff]
      %v820 = vld [vmem:[#allocation2 + $0x130] sm:$0xff]
      %v821 = vld [vmem:[#allocation2 + $0x138] sm:$0xff]
      %v822 = vld [vmem:[#allocation2 + $0x140] sm:$0xff]
      %v823 = vld [vmem:[#allocation2 + $0x148] sm:$0xff]
      %v824 = vld [vmem:[#allocation2 + $0x150] sm:$0xff]
      %v825 = vld [vmem:[#allocation2 + $0x158] sm:$0xff]
      %v826 = vld [vmem:[#allocation2 + $0x160] sm:$0xff]
      %v827 = vld [vmem:[#allocation2 + $0x168] sm:$0xff]
      %v828 = vld [vmem:[#allocation2 + $0x170] sm:$0xff]
      %v829 = vld [vmem:[#allocation2 + $0x178] sm:$0xff]
      %v830 = vld [vmem:[#allocation2 + $0x180] sm:$0xff]
      %v831 = vld [vmem:[#allocation2 + $0x188] sm:$0xff]
      %v832 = vld [vmem:[#allocation2 + $0x190] sm:$0xff]
      %v833 = vld [vmem:[#allocation2 + $0x198] sm:$0xff]
      %v834 = vld [vmem:[#allocation2 + $0x1a0] sm:$0xff]
      %v835 = vld [vmem:[#allocation2 + $0x1a8] sm:$0xff]
      %v836 = vld [vmem:[#allocation2 + $0x1b0] sm:$0xff]
      %v837 = vld [vmem:[#allocation2 + $0x1b8] sm:$0xff]
      %v838 = vld [vmem:[#allocation2 + $0x1c0] sm:$0xff]
      %v839 = vld [vmem:[#allocation2 + $0x1c8] sm:$0xff]
      %v840 = vld [vmem:[#allocation2 + $0x1d0] sm:$0xff]
      %v841 = vld [vmem:[#allocation2 + $0x1d8] sm:$0xff]
      %v842 = vld [vmem:[#allocation2 + $0x1e0] sm:$0xff]
      %v843 = vld [vmem:[#allocation2 + $0x1e8] sm:$0xff]
      %v844 = vld [vmem:[#allocation2 + $0x1f0] sm:$0xff]
      %v845 = vld [vmem:[#allocation2 + $0x1f8] sm:$0xff]
      %v846 = vld [vmem:[#allocation2 + $0x200] sm:$0xff]
      %v847 = vld [vmem:[#allocation2 + $0x208] sm:$0xff]
      %v848 = vld [vmem:[#allocation2 + $0x210] sm:$0xff]
      %v849 = vld [vmem:[#allocation2 + $0x218] sm:$0xff]
      %v850 = vld [vmem:[#allocation2 + $0x220] sm:$0xff]
      %v851 = vld [vmem:[#allocation2 + $0x228] sm:$0xff]
      %v852 = vld [vmem:[#allocation2 + $0x230] sm:$0xff]
      %v853 = vld [vmem:[#allocation2 + $0x238] sm:$0xff]
      %v854 = vld [vmem:[#allocation2 + $0x240] sm:$0xff]
      %v855 = vld [vmem:[#allocation2 + $0x248] sm:$0xff]
      %v856 = vld [vmem:[#allocation2 + $0x250] sm:$0xff]
      %v857 = vld [vmem:[#allocation2 + $0x258] sm:$0xff]
      %v858 = vld [vmem:[#allocation2 + $0x260] sm:$0xff]
      %v859 = vld [vmem:[#allocation2 + $0x268] sm:$0xff]
      %v860 = vld [vmem:[#allocation2 + $0x270] sm:$0xff]
      %v861 = vld [vmem:[#allocation2 + $0x278] sm:$0xff]
      %v862 = vld [vmem:[#allocation2 + $0x280] sm:$0xff]
      %v863 = vld [vmem:[%s1] sm:$0x3f]
      %865 = vset.pattern.permute.xlu0 0
      %866 = vperm.xlu0 %865, %v863
      %v867 = vpop.permute.xlu0 %866
      %vm869 = vcmask 719872
      %v871 = vsel %vm869, %v781, 0
      %873 = vmatprep.subr.mxu0 %v783
      %874 = vmatpush1.msra.mxu0 %v782
      %875 = vmatprep.subr.mxu0 %v786
      %876 = vmatpush1.msra.mxu0 %v785
      %877 = vmatprep.subr.mxu0 %v789
      %878 = vmatpush1.msra.mxu0 %v788
      %879 = vmatprep.subr.mxu0 %v792
      %880 = vmatpush1.msra.mxu0 %v791
      %881 = vmatprep.subr.mxu0 %v795
      %882 = vmatpush1.msra.mxu0 %v794
      %883 = vmatprep.subr.mxu0 %v798
      %884 = vmatpush1.msra.mxu0 %v797
      %885 = vmatprep.subr.mxu0 %v801
      %886 = vmatpush1.msra.mxu0 %v800
      %887 = vmatprep.subr.mxu0 %v804
      %888 = vmatpush1.msra.mxu0 %v803
      %889 = vmatprep.subr.mxu0 %v807
      %890 = vmatpush1.msra.mxu0 %v806
      %891 = vmatprep.subr.mxu0 %v810
      %892 = vmatpush1.msra.mxu0 %v809
      %893 = vmatprep.subr.mxu0 %v813
      %894 = vmatpush1.msra.mxu0 %v812
      %895 = vmatprep.subr.mxu0 %v816
      %896 = vmatpush1.msra.mxu0 %v815
      %897 = vmatprep.subr.mxu0 %v819
      %898 = vmatpush1.msra.mxu0 %v818
      %899 = vmatprep.subr.mxu0 %v822
      %900 = vmatpush1.msra.mxu0 %v821
      %901 = vmatprep.subr.mxu0 %v825
      %902 = vmatpush1.msra.mxu0 %v824
      %903 = vmatprep.subr.mxu0 %v828
      %904 = vmatpush1.msra.mxu0 %v827
      %905 = vmatprep.subr.mxu0 %v831
      %906 = vmatpush1.msra.mxu0 %v830
      %907 = vmatprep.subr.mxu0 %v834
      %908 = vmatpush1.msra.mxu0 %v833
      %909 = vmatprep.subr.mxu0 %v837
      %910 = vmatpush1.msra.mxu0 %v836
      %911 = vmatprep.subr.mxu0 %v840
      %912 = vmatpush1.msra.mxu0 %v839
      %913 = vmatprep.subr.mxu0 %v843
      %914 = vmatpush1.msra.mxu0 %v842
      %915 = vmatprep.subr.mxu0 %v846
      %916 = vmatpush1.msra.mxu0 %v845
      %917 = vmatprep.subr.mxu0 %v849
      %918 = vmatpush1.msra.mxu0 %v848
      %919 = vmatprep.subr.mxu0 %v852
      %920 = vmatpush1.msra.mxu0 %v851
      %921 = vmatprep.subr.mxu0 %v855
      %922 = vmatpush1.msra.mxu0 %v854
      %923 = vmatprep.subr.mxu0 %v858
      %924 = vmatpush1.msra.mxu0 %v857
      %925 = vmatprep.subr.mxu0 %v861
      %926 = vmatpush1.msra.mxu0 %v860
      %927 = vmatprep.subr.mxu0 0.0
      %928 = vmatpush1.msra.mxu0 0.0
      %929 = vmatprep.subr.mxu0 0.0
      %930 = vmatpush1.msra.mxu0 0.0
      %931 = vmatprep.subr.mxu0 0.0
      %932 = vmatpush1.msra.mxu0 0.0
      %933 = vmatprep.subr.mxu0 0.0
      %934 = vmatpush1.msra.mxu0 0.0
      %935 = vmatprep.subr.mxu0 0.0
      %936 = vmatpush1.msra.mxu0 0.0
      %937 = vmatprep.mubr.f32.mxu0 %v871
      %938 = vmatmul.mubr.f32.gmra.mrb[0].mxu0 %v780
      %v939 = vpop.f32.mrb[0].mxu0
      %v940 = vadd.f32 %v867, %v939
      %v941 = vpop.f32.mrb[0].mxu0
      %v942 = vadd.f32 %v867, %v941
      %943 = vdwg.mxu0
      %944 = vmatprep.subr.mxu0 0.0
      %945 = vmatpush1.msra.mxu0 %v784
      %946 = vmatprep.subr.mxu0 0.0
      %947 = vmatpush1.msra.mxu0 %v787
      %948 = vmatprep.subr.mxu0 0.0
      %949 = vmatpush1.msra.mxu0 %v790
      %950 = vmatprep.subr.mxu0 0.0
      %951 = vmatpush1.msra.mxu0 %v793
      %952 = vmatprep.subr.mxu0 0.0
      %953 = vmatpush1.msra.mxu0 %v796
      %954 = vmatprep.subr.mxu0 0.0
      %955 = vmatpush1.msra.mxu0 %v799
      %956 = vmatprep.subr.mxu0 0.0
      %957 = vmatpush1.msra.mxu0 %v802
      %958 = vmatprep.subr.mxu0 0.0
      %959 = vmatpush1.msra.mxu0 %v805
      %960 = vmatprep.subr.mxu0 0.0
      %961 = vmatpush1.msra.mxu0 %v808
      %962 = vmatprep.subr.mxu0 0.0
      %963 = vmatpush1.msra.mxu0 %v811
      %964 = vmatprep.subr.mxu0 0.0
      %965 = vmatpush1.msra.mxu0 %v814
      %966 = vmatprep.subr.mxu0 0.0
      %967 = vmatpush1.msra.mxu0 %v817
      %968 = vmatprep.subr.mxu0 0.0
      %969 = vmatpush1.msra.mxu0 %v820
      %970 = vmatprep.subr.mxu0 0.0
      %971 = vmatpush1.msra.mxu0 %v823
      %972 = vmatprep.subr.mxu0 0.0
      %973 = vmatpush1.msra.mxu0 %v826
      %974 = vmatprep.subr.mxu0 0.0
      %975 = vmatpush1.msra.mxu0 %v829
      %976 = vmatprep.subr.mxu0 0.0
      %977 = vmatpush1.msra.mxu0 %v832
      %978 = vmatprep.subr.mxu0 0.0
      %979 = vmatpush1.msra.mxu0 %v835
      %980 = vmatprep.subr.mxu0 0.0
      %981 = vmatpush1.msra.mxu0 %v838
      %982 = vmatprep.subr.mxu0 0.0
      %983 = vmatpush1.msra.mxu0 %v841
      %984 = vmatprep.subr.mxu0 0.0
      %985 = vmatpush1.msra.mxu0 %v844
      %986 = vmatprep.subr.mxu0 0.0
      %987 = vmatpush1.msra.mxu0 %v847
      %988 = vmatprep.subr.mxu0 0.0
      %989 = vmatpush1.msra.mxu0 %v850
      %990 = vmatprep.subr.mxu0 0.0
      %991 = vmatpush1.msra.mxu0 %v853
      %992 = vmatprep.subr.mxu0 0.0
      %993 = vmatpush1.msra.mxu0 %v856
      %994 = vmatprep.subr.mxu0 0.0
      %995 = vmatpush1.msra.mxu0 %v859
      %996 = vmatprep.subr.mxu0 0.0
      %997 = vmatpush1.msra.mxu0 %v862
      %998 = vmatprep.subr.mxu0 0.0
      %999 = vmatpush1.msra.mxu0 0.0
      %1000 = vmatprep.subr.mxu0 0.0
      %1001 = vmatpush1.msra.mxu0 0.0
      %1002 = vmatprep.subr.mxu0 0.0
      %1003 = vmatpush1.msra.mxu0 0.0
      %1004 = vmatprep.subr.mxu0 0.0
      %1005 = vmatpush1.msra.mxu0 0.0
      %1006 = vmatprep.subr.mxu0 0.0
      %1007 = vmatpush1.msra.mxu0 0.0
      %1008 = vmatprep.mubr.f32.mxu0 %v871
      %1009 = vmatmul.mubr.f32.gmra.mrb[0].mxu0 %v780
      %v1010 = vpop.f32.mrb[0].mxu0
      %v1011 = vadd.f32 %v867, %v1010
      %v1012 = vpop.f32.mrb[0].mxu0
      %1013 = vdwg.mxu0
      %1014 = vst [vmem:[%s394] sm:$0x3f] %v940
      %1015 = vst [vmem:[%s394 + $0x8] sm:$0x3f] %v942
      %vm1016 = vcmask 553984
      %1017 = vst.msk [vmem:[%s394 + $0x10] sm:$0x3f] %vm1016, %v1011
      %v1018 = vld [vmem:[%s2] sm:$0x7]
      %v1020 = vlaneseq
      %v1021 = vshrl.u32 %v1020, 7
      %v1022 = vsub.s32 0, %v1021
      %v1023 = vrot.slane %v1018, %v1022
      %v1024 = vlaneseq
      %v1025 = vshrl.u32 %v1024, 7
      %v1026 = vsub.s32 1, %v1025
      %v1027 = vrot.slane %v1018, %v1026
      %v1028 = vlaneseq
      %v1029 = vshrl.u32 %v1028, 7
      %v1030 = vsub.s32 2, %v1029
      %v1031 = vrot.slane %v1018, %v1030
      %v1035 = vmul.f32 %v940, %v1023
      %v1036 = vmul.f32 %v942, %v1027
      %v1037 = vmul.f32 %v1011, %v1031
      %v1038 = vld [vmem:[#allocation3] sm:$0x3f]
      %vm1039 = vcmask 1045504
      %v1040 = vsel %vm1039, %v1035, 0.0
      %v1041 = vsel %vm1039, %v1036, 0.0
      %v1042 = vadd.f32 %v1040, %v1041
      %v1043 = vsel %vm1016, %v1037, 0.0
      %v1044 = vadd.f32 %v1042, %v1043
      %1045 = vadd.xlane.f32.xlu0 %v1044
      %v1046 = vpop.xlane.xlu0 %1045
      %v1047 = vadd.f32 %v1038, %v1046
      %vm1048 = vcmask 5120
      %1049 = vst.msk [vmem:[#allocation3] sm:$0x3f] %vm1048, %v1047
      %v1050 = vld [vmem:[#allocation4] sm:$0x3f]
      %v1051 = vmul.f32 %v1035, %v940
      %v1052 = vmul.f32 %v1036, %v942
      %v1053 = vmul.f32 %v1037, %v1011
      %v1054 = vsel %vm1039, %v1051, 0.0
      %v1055 = vsel %vm1039, %v1052, 0.0
      %v1056 = vadd.f32 %v1054, %v1055
      %v1057 = vsel %vm1016, %v1053, 0.0
      %v1058 = vadd.f32 %v1056, %v1057
      %1059 = vadd.xlane.f32.xlu0 %v1058
      %v1060 = vpop.xlane.xlu0 %1059
      %v1061 = vadd.f32 %v1050, %v1060
      %1062 = vst.msk [vmem:[#allocation4] sm:$0x3f] %vm1048, %v1061
      // Predicated region
      $region49: #{conv_init_forward.2} parent=43 // pred_check
        _
      $region50: #{conv_init_forward.2} parent=43 // pred_check_branch
        %1064 = sbr.rel (%p401) target = $region52
      $region51: #{conv_init_forward.2} parent=43 // pred_region
        %v1065 = vld [vmem:[#allocation3] sm:$0x3f]
        %v1066 = vmul.f32 %v1065, 0.00012207031
        %v1067 = vld [vmem:[#allocation4] sm:$0x3f]
        %v1068 = vmul.f32 %v1067, 0.00012207031
        %v1069 = vmul.f32 %v1066, %v1066
        %v1070 = vsub.f32 %v1068, %v1069
        %v1071 = vadd.f32 %v1070, 1e-05
        %v1072 = vrsqrt.pop %v1071
        %1073 = vst.msk [vmem:[%s7] sm:$0x3f] %vm1048, %v1066
        %1075 = vrot.lane.b32.xlu0 %v1072, 1
        %v1076 = vpop.permute.xlu0 %1075
        %vm1078 = vcmask 13320
        %1079 = vst.msk [vmem:[%s7] sm:$0x3f] %vm1078, %v1076
      $region52: #{conv_init_forward.2} parent=43 // pred_fallthru
        _
      %p1080 = scmp.lt.s32.totalorder %s23, 1
      %s1081 = scalar_select %p1080, %s23, 1
      %p1082 = scmp.lt.s32.totalorder %s24, 15
      %s1083 = scalar_select %p1082, %s24, 15
      %s1084 = smul.addr %s1083, 3
      %s1085 = smul.addr %s1081, 48
      %s1086 = sadd.s32 %s1084, %s1085
      %s1087 = smul.addr %s1086, 8
      %s1088 = scalar_lea.vmem %s6, %s1087
      // Predicated region
      $region53: #{conv_init_forward.2} parent=43 // pred_check
        %p1089 = pneg %p202
      $region54: #{conv_init_forward.2} parent=43 // pred_check_branch
        %1091 = sbr.rel (%p1089) target = $region56
      $region55: #{conv_init_forward.2} parent=43 // pred_region
        _
      $region56: #{conv_init_forward.2} parent=43 // pred_fallthru
        _
      // Predicated region
      $region57: #{conv_init_forward.2} parent=43 // pred_check
        %p1092 = pneg %p223
      $region58: #{conv_init_forward.2} parent=43 // pred_check_branch
        %1094 = sbr.rel (%p1092) target = $region60
      $region59: #{conv_init_forward.2} parent=43 // pred_region
        _
      $region60: #{conv_init_forward.2} parent=43 // pred_fallthru
        _
      // Predicated region
      $region61: #{conv_init_forward.2} parent=43 // pred_check
        %p1095 = pneg %p223
      $region62: #{conv_init_forward.2} parent=43 // pred_check_branch
        %1097 = sbr.rel (%p1095) target = $region64
      $region63: #{conv_init_forward.2} parent=43 // pred_region
        _
      $region64: #{conv_init_forward.2} parent=43 // pred_fallthru
        _
    $region44: #{conv_init_forward.2} parent=5 // pred_fallthru
      _
    %p1098 = scmp.le.s32.totalorder 2, %s14
    // Predicated region
    $region65: #{conv_init_forward.2} parent=5 // pred_check
      %p1099 = pneg %p1098
    $region66: #{conv_init_forward.2} parent=5 // pred_check_branch
      %1101 = sbr.rel (%p1099) target = $region68
    $region67: #{conv_init_forward.2} parent=5 // pred_region
      %s1102 = ssub.s32 %s14, 2
      // Predicated region
      $region69: #{conv_init_forward.2} parent=67 // pred_check
        %p1103 = pneg %p208
      $region70: #{conv_init_forward.2} parent=67 // pred_check_branch
        %1105 = sbr.rel (%p1103) target = $region72
      $region71: #{conv_init_forward.2} parent=67 // pred_region
        %p1106 = scmp.lt.s32.totalorder %s25, 1
        %s1107 = scalar_select %p1106, %s25, 1
        %p1108 = scmp.lt.s32.totalorder %s26, 15
        %s1109 = scalar_select %p1108, %s26, 15
        %s1110 = smul.addr %s1109, 3
        %s1111 = smul.addr %s1107, 48
        %s1112 = sadd.s32 %s1110, %s1111
        %s1113 = smul.addr %s1112, 8
        %s1114 = scalar_lea.vmem %s6, %s1113
      $region72: #{conv_init_forward.2} parent=67 // pred_fallthru
        _
    $region68: #{conv_init_forward.2} parent=5 // pred_fallthru
      _
  $region6: #{conv_init_forward.2} parent=0 // loop_footer
    %s18 = sadd.s32 1, %s14
  $region7: #{conv_init_forward.2} parent=0 // loop_footer_branch
    %13 = sbr.rel target = $region3
  $region8: #{conv_init_forward.2} parent=0 // loop_exit
    _

</llo_original>
